<compile_context>
chip_gen: v7x
topology: tpu7x:2x2x1
jax: 0.10.0
libtpu: 0.0.40
codegen_flags: <defaults>
</compile_context>

<pallas_src>
import functools

import jax
import jax.numpy as jnp
from jax.experimental import pallas as pl
from jax.experimental.pallas import tpu as pltpu

PATCH = 16
HIDDEN = 768        # DINOv2 hidden size
PROJ_HIDDEN = 256   # SimCLR projection hidden
EMBED = 128         # SimCLR embedding_size
TAU = 0.1
LANES = 128
MAX_TILE_ROWS = 2048                      # keep <=2048 so v7x VMEM stays safe
VMEM_LIMIT_BLEND = 32 * 1024 * 1024       # blend is DMA-bound; small tiles
VMEM_LIMIT_EMBED = 48 * 1024 * 1024       # Kernel A holds patches+tok resident


def _vmem_spec():
    return pl.BlockSpec(memory_space=pltpu.MemorySpace.VMEM)


# ----------------------------------------------------------------------------
# Shared traced math: encoder stand-in + projection head (SimCLR forward,
# linear_eval=True; Dropout is identity at inference time).  All matmuls use
# bf16 operands + f32 accumulation (native MXU path).
# ----------------------------------------------------------------------------
def _simclr_embed(x, pool, wp, bp, w1, b1, w2, b2):
    # x: (B*P, Dpatch) bf16; wp: (Dpatch, HIDDEN) bf16.  One clean 2D matmul.
    tok = jnp.dot(x, wp, preferred_element_type=jnp.float32) + bp   # (B*P, H)
    # LayerNorm (no affine), two-pass (mean-subtracted) variance for safety.
    mu = jnp.mean(tok, axis=-1, keepdims=True)
    d = tok - mu
    var = jnp.mean(d * d, axis=-1, keepdims=True)
    tok = d * jax.lax.rsqrt(var + 1e-6)
    # Token mean-pool via the precomputed (B, B*P) bf16 pooling matrix
    # (built once in the wrapper — no in-kernel iota/where mask construction).
    enc = jnp.dot(pool, tok.astype(jnp.bfloat16),
                  preferred_element_type=jnp.float32)                # (B, H)
    # Projection head: Linear -> Dropout(eval: identity) -> ReLU -> Linear.
    h = jnp.maximum(
        jnp.dot(enc.astype(jnp.bfloat16), w1,
                preferred_element_type=jnp.float32) + b1, 0.0)
    return jnp.dot(h.astype(jnp.bfloat16), w2,
                   preferred_element_type=jnp.float32) + b2          # (B, EMBED)


# ----------------------------------------------------------------------------
# Kernel: retrieval model only (used to build the cached gallery embeddings).
# ----------------------------------------------------------------------------
def embed_kernel(x_ref, pool_ref, wp_ref, bp_ref, w1_ref, b1_ref, w2_ref,
                 b2_ref, o_ref):
    o_ref[...] = _simclr_embed(
        x_ref[...], pool_ref[...], wp_ref[...], bp_ref[...], w1_ref[...],
        b1_ref[...], w2_ref[...], b2_ref[...])


# ----------------------------------------------------------------------------
# Kernel A: fused query embedding + cosine sim + top-2 + temperature softmax.
# The gallery embeddings arrive pre-normalized (bf16), so cosine similarity is
# a single bf16 matmul; the query is normalized once with an EUP rsqrt.
# Only the (B,2) indices/weights are emitted (no dense (B,N) scatter).
# ----------------------------------------------------------------------------
def query_topk_kernel(x_ref, pool_ref, wp_ref, bp_ref, w1_ref, b1_ref, w2_ref,
                      b2_ref, g_ref, idx_out_ref, wgt_out_ref, *, tau, n):
    q = _simclr_embed(
        x_ref[...], pool_ref[...], wp_ref[...], bp_ref[...], w1_ref[...],
        b1_ref[...], w2_ref[...], b2_ref[...])                   # (B, EMBED) f32

    # Normalize the query: rsqrt(max(||q||^2, eps^2)) == 1/max(||q||, eps),
    # a single EUP op (no N-wide divide anywhere).
    q2 = jnp.sum(q * q, axis=-1, keepdims=True)
    q_hat = (q * jax.lax.rsqrt(jnp.maximum(q2, 1e-16))).astype(jnp.bfloat16)

    # Cosine similarity against the pre-normalized bf16 gallery, f32 accum.
    sim = jax.lax.dot_general(
        q_hat, g_ref[...], (((1,), (1,)), ((), ())),
        preferred_element_type=jnp.float32)                      # (B, N)

    col = jax.lax.broadcasted_iota(jnp.int32, sim.shape, 1)
    # top-1 (indices clamped so degenerate rows can never index OOB)
    v1 = jnp.max(sim, axis=-1, keepdims=True)
    i1 = jnp.min(jnp.where(sim == v1, col, n), axis=-1, keepdims=True)
    i1 = jnp.minimum(i1, n - 1)
    # top-2
    sim_m = jnp.where(col == i1, -jnp.inf, sim)
    v2 = jnp.max(sim_m, axis=-1, keepdims=True)
    i2 = jnp.min(jnp.where(sim_m == v2, col, n), axis=-1, keepdims=True)
    i2 = jnp.minimum(i2, n - 1)

    # softmax([v1, v2] / tau), numerically stable (v1 >= v2).
    z = jnp.exp((v2 - v1) / tau)
    w_top1 = 1.0 / (1.0 + z)

    idx_out_ref[:, 0:1] = i1
    idx_out_ref[:, 1:2] = i2
    wgt_out_ref[:, 0:1] = w_top1
    wgt_out_ref[:, 1:2] = 1.0 - w_top1


# ----------------------------------------------------------------------------
# Kernel B: sparse top-2 gallery blend, SINGLE step per (b, column-tile).
# Both selected gallery rows are separate prefetch-indexed inputs, so their
# DMAs overlap and there is no output read-modify-write.
# ----------------------------------------------------------------------------
def blend_kernel(idx_ref, wgt_ref, g0_ref, g1_ref, out_ref):
    del idx_ref  # consumed by the index_maps only
    b = pl.program_id(0)
    w0 = wgt_ref[b, 0]
    w1 = wgt_ref[b, 1]
    # Single cast to f32, f32 multiply/accumulate (v5e has no bf16 VPU),
    # one lane-dense unmasked store.
    out_ref[...] = (g0_ref[...].astype(jnp.float32) * w0
                    + g1_ref[...].astype(jnp.float32) * w1)


# ----------------------------------------------------------------------------
# Wrappers (glue: patch extraction, cache preparation, pallas_call plumbing)
# ----------------------------------------------------------------------------
def _extract_patches(x):
    """(B,C,H,W) -> ((B*P, C*16*16) bf16, P) in nn.Conv2d(k=16,s=16) order."""
    B, C, H, W = x.shape
    p = PATCH
    patches = x.reshape(B, C, H // p, p, W // p, p).transpose(0, 2, 4, 1, 3, 5)
    tokens = (H // p) * (W // p)
    return patches.reshape(B * tokens, C * p * p).astype(jnp.bfloat16), tokens


def _pool_matrix(batch, tokens):
    """(B, B*P) bf16 mean-pool matrix, built in the wrapper (not per-kernel)."""
    eye = jnp.eye(batch, dtype=jnp.float32)
    return (jnp.repeat(eye, tokens, axis=1) / float(tokens)).astype(jnp.bfloat16)


def retrieval_model_forward(images, params):
    """SimCLR.forward (linear_eval=True): encoder -> projection, one launch."""
    B = images.shape[0]
    patches, tokens = _extract_patches(images)
    pool = _pool_matrix(B, tokens)
    return pl.pallas_call(
        embed_kernel,
        out_shape=jax.ShapeDtypeStruct((B, EMBED), jnp.float32),
        in_specs=[_vmem_spec()] * 8,
        out_specs=_vmem_spec(),
        compiler_params=pltpu.CompilerParams(vmem_limit_bytes=VMEM_LIMIT_EMBED),
    )(patches, pool, params["wp"], params["bp"], params["w1"], params["b1"],
      params["w2"], params["b2"])


def query_topk_forward(query_image, params, g_hat, tau=TAU):
    B = query_image.shape[0]
    patches, tokens = _extract_patches(query_image)
    pool = _pool_matrix(B, tokens)
    N = g_hat.shape[0]
    kernel = functools.partial(query_topk_kernel, tau=tau, n=N)
    return pl.pallas_call(
        kernel,
        out_shape=(jax.ShapeDtypeStruct((B, 2), jnp.int32),
                   jax.ShapeDtypeStruct((B, 2), jnp.float32)),
        in_specs=[_vmem_spec()] * 9,
        out_specs=(_vmem_spec(), _vmem_spec()),
        compiler_params=pltpu.CompilerParams(vmem_limit_bytes=VMEM_LIMIT_EMBED),
    )(patches, pool, params["wp"], params["bp"], params["w1"], params["b1"],
      params["w2"], params["b2"], g_hat)


def _pick_tile_rows(r, max_rows=MAX_TILE_ROWS):
    """Column-tile height (in 128-lane rows).  Always divides r; non-full
    tiles are multiples of 16 so bf16 (16,128) / f32 (8,128) tilings hold.
    max_rows=2048 keeps live blend VMEM ~3 MiB (<< v7x's 64 MiB)."""
    if r <= max_rows:
        return r
    best = 0
    d = 16
    while d <= max_rows:
        if r % d == 0:
            best = d
        d += 16
    return best if best else r


def blend_forward(topk_idx, topk_wgt, payload):
    """guide = w[b,0]*payload[idx[b,0]] + w[b,1]*payload[idx[b,1]].
    Grid (B, n_col); k-reduction axis removed — one store per tile."""
    N, R, L = payload.shape
    B = topk_idx.shape[0]
    tile_r = _pick_tile_rows(R)
    n_col = R // tile_r
    # TODO(synk): if the index-driven gallery fetch exposes DMA latency at
    # large shapes, add pipeline_mode=pl.Buffered(3) to the gallery specs.
    gal_spec0 = pl.BlockSpec((1, tile_r, L), lambda b, j, idx, w: (idx[b, 0], j, 0))
    gal_spec1 = pl.BlockSpec((1, tile_r, L), lambda b, j, idx, w: (idx[b, 1], j, 0))
    out = pl.pallas_call(
        blend_kernel,
        out_shape=jax.ShapeDtypeStruct((B, R, L), jnp.float32),
        grid_spec=pltpu.PrefetchScalarGridSpec(
            num_scalar_prefetch=2,                      # topk_idx, topk_wgt
            grid=(B, n_col),
            in_specs=[gal_spec0, gal_spec1],
            out_specs=pl.BlockSpec(
                (1, tile_r, L), lambda b, j, idx, w: (b, j, 0)),
        ),
        compiler_params=pltpu.CompilerParams(
            dimension_semantics=("parallel", "parallel"),
            vmem_limit_bytes=VMEM_LIMIT_BLEND),
    )(topk_idx, topk_wgt, payload, payload)
    return out.reshape(B, R * L)


@jax.jit
def prepare_gallery_cache(params, gallery_images, gallery_masks):
    """Done ONCE when the gallery is cached: pre-normalized bf16 embeddings
    and the lane-dense bf16 flattened image+mask payload streamed by the
    blend kernel."""
    g_emb = retrieval_model_forward(gallery_images, params)      # (N, EMBED)
    g_norm = jnp.maximum(
        jnp.sqrt(jnp.sum(g_emb * g_emb, axis=-1, keepdims=True)), 1e-8)
    g_hat = (g_emb / g_norm).astype(jnp.bfloat16)                # pre-normalized

    N, C, H, W = gallery_images.shape
    img_flat = gallery_images.reshape(N, C * H * W)
    msk_flat = gallery_masks.astype(jnp.float32).reshape(N, H * W)
    payload = jnp.concatenate([img_flat, msk_flat], axis=-1)     # (N, CHW+HW)
    total = payload.shape[1]
    rows = -(-total // LANES)
    if rows > MAX_TILE_ROWS:
        # Guarantee a dividing column tile (multiple of 256) for big payloads;
        # small payloads stay unpadded (single tile, no extra HBM traffic).
        rows = -(-rows // 256) * 256
    pad = rows * LANES - total
    if pad:
        payload = jnp.pad(payload, ((0, 0), (0, pad)))
    payload = payload.reshape(N, rows, LANES).astype(jnp.bfloat16)
    return {"g_emb": g_hat, "payload": payload}


@jax.jit
def joint_training_forward(query_image, params, gallery_cache):
    """JointTrainingModule.forward — returns (guide_image, guide_mask)."""
    B, C, H, W = query_image.shape
    topk_idx, topk_wgt = query_topk_forward(
        query_image, params, gallery_cache["g_emb"], TAU)
    blended = blend_forward(topk_idx, topk_wgt, gallery_cache["payload"])
    chw, hw = C * H * W, H * W
    guide_image = blended[:, :chw].reshape(B, C, H, W)
    guide_mask = blended[:, chw:chw + hw].reshape(B, H, W)
    return guide_image, guide_mask


def init_params(key):
    ks = jax.random.split(key, 6)
    scale = 0.02
    conv_w = jax.random.normal(ks[0], (HIDDEN, 3, PATCH, PATCH), jnp.float32) * scale
    wp = conv_w.reshape(HIDDEN, -1).T.astype(jnp.bfloat16)        # (3*16*16, 768)
    bp = (jax.random.normal(ks[1], (HIDDEN,), jnp.float32) * scale).reshape(1, HIDDEN)
    w1 = (jax.random.normal(ks[2], (HIDDEN, PROJ_HIDDEN), jnp.float32) * scale
          ).astype(jnp.bfloat16)
    b1 = (jax.random.normal(ks[3], (PROJ_HIDDEN,), jnp.float32) * scale
          ).reshape(1, PROJ_HIDDEN)
    w2 = (jax.random.normal(ks[4], (PROJ_HIDDEN, EMBED), jnp.float32) * scale
          ).astype(jnp.bfloat16)
    b2 = (jax.random.normal(ks[5], (EMBED,), jnp.float32) * scale).reshape(1, EMBED)
    return {"wp": wp, "bp": bp, "w1": w1, "b1": b1, "w2": w2, "b2": b2}


if __name__ == "__main__":
    key = jax.random.PRNGKey(0)
    kq, kg, km, kp = jax.random.split(key, 4)

    B, C, H, W, N = 2, 3, 32, 32, 8
    query_image = jax.random.normal(kq, (B, C, H, W), jnp.float32)
    gallery_images = jax.random.normal(kg, (N, C, H, W), jnp.float32)
    gallery_masks = jax.random.randint(km, (N, H, W), 0, 4).astype(jnp.float32)

    params = init_params(kp)

    # Cache the gallery once (pre-normalized embeddings + bf16 payload).
    gallery_cache = prepare_gallery_cache(params, gallery_images, gallery_masks)
    jax.block_until_ready(gallery_cache)

    guide_image, guide_mask = joint_training_forward(
        query_image, params, gallery_cache)
    jax.block_until_ready((guide_image, guide_mask))

    assert guide_image.shape == (B, C, H, W)
    assert guide_mask.shape == (B, H, W)
    # each output row is a convex (top-2 softmax) combination of gallery rows
    assert bool(jnp.all(jnp.isfinite(guide_image)))
    assert bool(jnp.all(jnp.isfinite(guide_mask)))
    assert bool(jnp.all(guide_mask >= 0.0)) and bool(jnp.all(guide_mask <= 3.0))
    print("KERNEL_OK")
</pallas_src>

<mosaic_0001>
module attributes {stable_mosaic.version = 11 : i64} {
  func.func @embed_kernel(%arg0: memref<32x768xbf16, #tpu.memory_space<vmem>>, %arg1: memref<8x32xbf16, #tpu.memory_space<vmem>>, %arg2: memref<768x768xbf16, #tpu.memory_space<vmem>>, %arg3: memref<1x768xf32, #tpu.memory_space<vmem>>, %arg4: memref<768x256xbf16, #tpu.memory_space<vmem>>, %arg5: memref<1x256xf32, #tpu.memory_space<vmem>>, %arg6: memref<256x128xbf16, #tpu.memory_space<vmem>>, %arg7: memref<1x128xf32, #tpu.memory_space<vmem>>, %arg8: memref<8x128xf32, #tpu.memory_space<vmem>>) attributes {dimension_semantics = [], scalar_prefetch = 0 : i64, scratch_operands = 0 : i64, tpu.core_type = #tpu.core_type<tc>} {
    %c0 = arith.constant 0 : index
    %c0_0 = arith.constant 0 : index
    %0 = vector.load %arg0[%c0, %c0_0] : memref<32x768xbf16, #tpu.memory_space<vmem>>, vector<32x768xbf16>
    %c0_1 = arith.constant 0 : index
    %c0_2 = arith.constant 0 : index
    %1 = vector.load %arg1[%c0_1, %c0_2] : memref<8x32xbf16, #tpu.memory_space<vmem>>, vector<8x32xbf16>
    %c0_3 = arith.constant 0 : index
    %c0_4 = arith.constant 0 : index
    %2 = vector.load %arg2[%c0_3, %c0_4] : memref<768x768xbf16, #tpu.memory_space<vmem>>, vector<768x768xbf16>
    %c0_5 = arith.constant 0 : index
    %c0_6 = arith.constant 0 : index
    %3 = vector.load %arg3[%c0_5, %c0_6] : memref<1x768xf32, #tpu.memory_space<vmem>>, vector<1x768xf32>
    %c0_7 = arith.constant 0 : index
    %c0_8 = arith.constant 0 : index
    %4 = vector.load %arg4[%c0_7, %c0_8] : memref<768x256xbf16, #tpu.memory_space<vmem>>, vector<768x256xbf16>
    %c0_9 = arith.constant 0 : index
    %c0_10 = arith.constant 0 : index
    %5 = vector.load %arg5[%c0_9, %c0_10] : memref<1x256xf32, #tpu.memory_space<vmem>>, vector<1x256xf32>
    %c0_11 = arith.constant 0 : index
    %c0_12 = arith.constant 0 : index
    %6 = vector.load %arg6[%c0_11, %c0_12] : memref<256x128xbf16, #tpu.memory_space<vmem>>, vector<256x128xbf16>
    %c0_13 = arith.constant 0 : index
    %c0_14 = arith.constant 0 : index
    %7 = vector.load %arg7[%c0_13, %c0_14] : memref<1x128xf32, #tpu.memory_space<vmem>>, vector<1x128xf32>
    %cst = arith.constant dense<0.000000e+00> : vector<32x768xf32>
    %8 = tpu.matmul %0, %2, %cst {dimension_numbers = #tpu.dot_dimension_numbers<[1], [0], [0], [1], [0, 0, 1, 1], [], []>} : vector<32x768xbf16>, vector<768x768xbf16>, vector<32x768xf32> -> vector<32x768xf32>
    %9 = vector.broadcast %3 : vector<1x768xf32> to vector<32x768xf32>
    %10 = arith.addf %8, %9 : vector<32x768xf32>
    %cst_15 = arith.constant dense<0.000000e+00> : vector<32xf32>
    %11 = vector.multi_reduction <add>, %10, %cst_15 [1] : vector<32x768xf32> to vector<32xf32>
    %12 = vector.shape_cast %11 : vector<32xf32> to vector<32x1xf32>
    %cst_16 = arith.constant 7.680000e+02 : f32
    %13 = vector.broadcast %cst_16 : f32 to vector<32x1xf32>
    %14 = arith.divf %12, %13 : vector<32x1xf32>
    %15 = vector.broadcast %14 : vector<32x1xf32> to vector<32x768xf32>
    %16 = arith.subf %10, %15 : vector<32x768xf32>
    %17 = arith.mulf %16, %16 : vector<32x768xf32>
    %cst_17 = arith.constant dense<0.000000e+00> : vector<32xf32>
    %18 = vector.multi_reduction <add>, %17, %cst_17 [1] : vector<32x768xf32> to vector<32xf32>
    %19 = vector.shape_cast %18 : vector<32xf32> to vector<32x1xf32>
    %cst_18 = arith.constant 7.680000e+02 : f32
    %20 = vector.broadcast %cst_18 : f32 to vector<32x1xf32>
    %21 = arith.divf %19, %20 : vector<32x1xf32>
    %cst_19 = arith.constant 9.99999997E-7 : f32
    %22 = vector.broadcast %cst_19 : f32 to vector<32x1xf32>
    %23 = arith.addf %21, %22 : vector<32x1xf32>
    %24 = math.rsqrt %23 : vector<32x1xf32>
    %25 = vector.broadcast %24 : vector<32x1xf32> to vector<32x768xf32>
    %26 = arith.mulf %16, %25 : vector<32x768xf32>
    %27 = arith.truncf %26 : vector<32x768xf32> to vector<32x768xbf16>
    %cst_20 = arith.constant dense<0.000000e+00> : vector<8x768xf32>
    %28 = tpu.matmul %1, %27, %cst_20 {dimension_numbers = #tpu.dot_dimension_numbers<[1], [0], [0], [1], [0, 0, 1, 1], [], []>} : vector<8x32xbf16>, vector<32x768xbf16>, vector<8x768xf32> -> vector<8x768xf32>
    %29 = arith.truncf %28 : vector<8x768xf32> to vector<8x768xbf16>
    %cst_21 = arith.constant dense<0.000000e+00> : vector<8x256xf32>
    %30 = tpu.matmul %29, %4, %cst_21 {dimension_numbers = #tpu.dot_dimension_numbers<[1], [0], [0], [1], [0, 0, 1, 1], [], []>} : vector<8x768xbf16>, vector<768x256xbf16>, vector<8x256xf32> -> vector<8x256xf32>
    %31 = vector.broadcast %5 : vector<1x256xf32> to vector<8x256xf32>
    %32 = arith.addf %30, %31 : vector<8x256xf32>
    %cst_22 = arith.constant 0.000000e+00 : f32
    %33 = vector.broadcast %cst_22 : f32 to vector<8x256xf32>
    %34 = arith.maximumf %32, %33 : vector<8x256xf32>
    %35 = arith.truncf %34 : vector<8x256xf32> to vector<8x256xbf16>
    %cst_23 = arith.constant dense<0.000000e+00> : vector<8x128xf32>
    %36 = tpu.matmul %35, %6, %cst_23 {dimension_numbers = #tpu.dot_dimension_numbers<[1], [0], [0], [1], [0, 0, 1, 1], [], []>} : vector<8x256xbf16>, vector<256x128xbf16>, vector<8x128xf32> -> vector<8x128xf32>
    %37 = vector.broadcast %7 : vector<1x128xf32> to vector<8x128xf32>
    %38 = arith.addf %36, %37 : vector<8x128xf32>
    %c0_24 = arith.constant 0 : index
    %c0_25 = arith.constant 0 : index
    %39 = vector.load %arg8[%c0_24, %c0_25] : memref<8x128xf32, #tpu.memory_space<vmem>>, vector<8x128xf32>
    tpu.vector_store %arg8[%c0_24, %c0_25], %38 {strides = array<i32>} : memref<8x128xf32, #tpu.memory_space<vmem>>, vector<8x128xf32>,
    return
  }
}

</mosaic_0001>

<llo_original>
// kernel: prepare_gallery_cache.1
$region0: #{prepare_gallery_cache.1}
  #allocation0 [shape = 'u32[]', space=smem, size = 0x4, offset = 0x4, fixed_abs, tag = 'smem constant byte address 0x4 - core index']
  #allocation1 [shape = 'u32[144,128]{1,0:T(1,128)}', space=vmem, size = 0x12000, scoped, tag = 'internal scratch']
  %s0 = inlined_call_operand.vmem [shape: bf16[32,768], index: 0, kind: input, shape index: {}]
  %s1 = inlined_call_operand.vmem [shape: bf16[8,32], index: 1, kind: input, shape index: {}]
  %s2 = inlined_call_operand.vmem [shape: bf16[768,768], index: 2, kind: input, shape index: {}]
  %s3 = inlined_call_operand.vmem [shape: f32[1,768], index: 3, kind: input, shape index: {}]
  %s4 = inlined_call_operand.vmem [shape: bf16[768,256], index: 4, kind: input, shape index: {}]
  %s5 = inlined_call_operand.vmem [shape: f32[1,256], index: 5, kind: input, shape index: {}]
  %s6 = inlined_call_operand.vmem [shape: bf16[256,128], index: 6, kind: input, shape index: {}]
  %s7 = inlined_call_operand.vmem [shape: f32[1,128], index: 7, kind: input, shape index: {}]
  %s8 = inlined_call_operand.vmem [shape: f32[8,128], index: 8, kind: output, shape index: {}]
  %s9 = sld [smem:[#allocation0]]
  $region42: #{prepare_gallery_cache.1} parent=0
    _
  %s11 = ssub.s32 1, %s9
  %s12 = scalar_select 0, %s11, %s9
  // Predicated region
  $region2: #{prepare_gallery_cache.1} parent=0 // pred_check
    _
  $region3: #{prepare_gallery_cache.1} parent=0 // pred_check_branch
    %14 = sbr.rel (0) target = $region5
  $region4: #{prepare_gallery_cache.1} parent=0 // pred_region
    _
  $region5: #{prepare_gallery_cache.1} parent=0 // pred_fallthru
    _
  // Predicated region
  $region6: #{prepare_gallery_cache.1} parent=0 // pred_check
    _
  $region7: #{prepare_gallery_cache.1} parent=0 // pred_check_branch
    %16 = sbr.rel (0) target = $region9
  $region8: #{prepare_gallery_cache.1} parent=0 // pred_region
    _
  $region9: #{prepare_gallery_cache.1} parent=0 // pred_fallthru
    _
  // Predicated region
  $region10: #{prepare_gallery_cache.1} parent=0 // pred_check
    _
  $region11: #{prepare_gallery_cache.1} parent=0 // pred_check_branch
    %18 = sbr.rel (0) target = $region13
  $region12: #{prepare_gallery_cache.1} parent=0 // pred_region
    _
  $region13: #{prepare_gallery_cache.1} parent=0 // pred_fallthru
    _
  // Predicated region
  $region14: #{prepare_gallery_cache.1} parent=0 // pred_check
    _
  $region15: #{prepare_gallery_cache.1} parent=0 // pred_check_branch
    %20 = sbr.rel (0) target = $region17
  $region16: #{prepare_gallery_cache.1} parent=0 // pred_region
    _
  $region17: #{prepare_gallery_cache.1} parent=0 // pred_fallthru
    _
  // Predicated region
  $region18: #{prepare_gallery_cache.1} parent=0 // pred_check
    _
  $region19: #{prepare_gallery_cache.1} parent=0 // pred_check_branch
    %22 = sbr.rel (0) target = $region21
  $region20: #{prepare_gallery_cache.1} parent=0 // pred_region
    _
  $region21: #{prepare_gallery_cache.1} parent=0 // pred_fallthru
    _
  // Predicated region
  $region22: #{prepare_gallery_cache.1} parent=0 // pred_check
    _
  $region23: #{prepare_gallery_cache.1} parent=0 // pred_check_branch
    %24 = sbr.rel (0) target = $region25
  $region24: #{prepare_gallery_cache.1} parent=0 // pred_region
    _
  $region25: #{prepare_gallery_cache.1} parent=0 // pred_fallthru
    _
  // Predicated region
  $region26: #{prepare_gallery_cache.1} parent=0 // pred_check
    _
  $region27: #{prepare_gallery_cache.1} parent=0 // pred_check_branch
    %26 = sbr.rel (0) target = $region29
  $region28: #{prepare_gallery_cache.1} parent=0 // pred_region
    _
  $region29: #{prepare_gallery_cache.1} parent=0 // pred_fallthru
    _
  // Predicated region
  $region30: #{prepare_gallery_cache.1} parent=0 // pred_check
    _
  $region31: #{prepare_gallery_cache.1} parent=0 // pred_check_branch
    %28 = sbr.rel (0) target = $region33
  $region32: #{prepare_gallery_cache.1} parent=0 // pred_region
    _
  $region33: #{prepare_gallery_cache.1} parent=0 // pred_fallthru
    _
  %v30 = vld [vmem:[%s0] sm:$0xff]
  %v31 = vld [vmem:[%s0 + $0x8] sm:$0xff]
  %v32 = vld [vmem:[%s0 + $0x10] sm:$0xff]
  %v33 = vld [vmem:[%s0 + $0x18] sm:$0xff]
  %v34 = vld [vmem:[%s0 + $0x20] sm:$0xff]
  %v35 = vld [vmem:[%s0 + $0x28] sm:$0xff]
  %v36 = vld [vmem:[%s0 + $0x30] sm:$0xff]
  %v37 = vld [vmem:[%s0 + $0x38] sm:$0xff]
  %v38 = vld [vmem:[%s0 + $0x40] sm:$0xff]
  %v39 = vld [vmem:[%s0 + $0x48] sm:$0xff]
  %v40 = vld [vmem:[%s0 + $0x50] sm:$0xff]
  %v41 = vld [vmem:[%s0 + $0x58] sm:$0xff]
  %v42 = vld [vmem:[%s1] sm:$0xf]
  %v43 = vld [vmem:[%s2] sm:$0xff]
  %v44 = vld [vmem:[%s2 + $0x8] sm:$0xff]
  %v45 = vld [vmem:[%s2 + $0x10] sm:$0xff]
  %v46 = vld [vmem:[%s2 + $0x18] sm:$0xff]
  %v47 = vld [vmem:[%s2 + $0x20] sm:$0xff]
  %v48 = vld [vmem:[%s2 + $0x28] sm:$0xff]
  %v49 = vld [vmem:[%s2 + $0x30] sm:$0xff]
  %v50 = vld [vmem:[%s2 + $0x38] sm:$0xff]
  %v51 = vld [vmem:[%s2 + $0x40] sm:$0xff]
  %v52 = vld [vmem:[%s2 + $0x48] sm:$0xff]
  %v53 = vld [vmem:[%s2 + $0x50] sm:$0xff]
  %v54 = vld [vmem:[%s2 + $0x58] sm:$0xff]
  %v55 = vld [vmem:[%s2 + $0x60] sm:$0xff]
  %v56 = vld [vmem:[%s2 + $0x68] sm:$0xff]
  %v57 = vld [vmem:[%s2 + $0x70] sm:$0xff]
  %v58 = vld [vmem:[%s2 + $0x78] sm:$0xff]
  %v59 = vld [vmem:[%s2 + $0x80] sm:$0xff]
  %v60 = vld [vmem:[%s2 + $0x88] sm:$0xff]
  %v61 = vld [vmem:[%s2 + $0x90] sm:$0xff]
  %v62 = vld [vmem:[%s2 + $0x98] sm:$0xff]
  %v63 = vld [vmem:[%s2 + $0xa0] sm:$0xff]
  %v64 = vld [vmem:[%s2 + $0xa8] sm:$0xff]
  %v65 = vld [vmem:[%s2 + $0xb0] sm:$0xff]
  %v66 = vld [vmem:[%s2 + $0xb8] sm:$0xff]
  %v67 = vld [vmem:[%s2 + $0xc0] sm:$0xff]
  %v68 = vld [vmem:[%s2 + $0xc8] sm:$0xff]
  %v69 = vld [vmem:[%s2 + $0xd0] sm:$0xff]
  %v70 = vld [vmem:[%s2 + $0xd8] sm:$0xff]
  %v71 = vld [vmem:[%s2 + $0xe0] sm:$0xff]
  %v72 = vld [vmem:[%s2 + $0xe8] sm:$0xff]
  %v73 = vld [vmem:[%s2 + $0xf0] sm:$0xff]
  %v74 = vld [vmem:[%s2 + $0xf8] sm:$0xff]
  %v75 = vld [vmem:[%s2 + $0x100] sm:$0xff]
  %v76 = vld [vmem:[%s2 + $0x108] sm:$0xff]
  %v77 = vld [vmem:[%s2 + $0x110] sm:$0xff]
  %v78 = vld [vmem:[%s2 + $0x118] sm:$0xff]
  %v79 = vld [vmem:[%s2 + $0x120] sm:$0xff]
  %v80 = vld [vmem:[%s2 + $0x128] sm:$0xff]
  %v81 = vld [vmem:[%s2 + $0x130] sm:$0xff]
  %v82 = vld [vmem:[%s2 + $0x138] sm:$0xff]
  %v83 = vld [vmem:[%s2 + $0x140] sm:$0xff]
  %v84 = vld [vmem:[%s2 + $0x148] sm:$0xff]
  %v85 = vld [vmem:[%s2 + $0x150] sm:$0xff]
  %v86 = vld [vmem:[%s2 + $0x158] sm:$0xff]
  %v87 = vld [vmem:[%s2 + $0x160] sm:$0xff]
  %v88 = vld [vmem:[%s2 + $0x168] sm:$0xff]
  %v89 = vld [vmem:[%s2 + $0x170] sm:$0xff]
  %v90 = vld [vmem:[%s2 + $0x178] sm:$0xff]
  %v91 = vld [vmem:[%s2 + $0x180] sm:$0xff]
  %v92 = vld [vmem:[%s2 + $0x188] sm:$0xff]
  %v93 = vld [vmem:[%s2 + $0x190] sm:$0xff]
  %v94 = vld [vmem:[%s2 + $0x198] sm:$0xff]
  %v95 = vld [vmem:[%s2 + $0x1a0] sm:$0xff]
  %v96 = vld [vmem:[%s2 + $0x1a8] sm:$0xff]
  %v97 = vld [vmem:[%s2 + $0x1b0] sm:$0xff]
  %v98 = vld [vmem:[%s2 + $0x1b8] sm:$0xff]
  %v99 = vld [vmem:[%s2 + $0x1c0] sm:$0xff]
  %v100 = vld [vmem:[%s2 + $0x1c8] sm:$0xff]
  %v101 = vld [vmem:[%s2 + $0x1d0] sm:$0xff]
  %v102 = vld [vmem:[%s2 + $0x1d8] sm:$0xff]
  %v103 = vld [vmem:[%s2 + $0x1e0] sm:$0xff]
  %v104 = vld [vmem:[%s2 + $0x1e8] sm:$0xff]
  %v105 = vld [vmem:[%s2 + $0x1f0] sm:$0xff]
  %v106 = vld [vmem:[%s2 + $0x1f8] sm:$0xff]
  %v107 = vld [vmem:[%s2 + $0x200] sm:$0xff]
  %v108 = vld [vmem:[%s2 + $0x208] sm:$0xff]
  %v109 = vld [vmem:[%s2 + $0x210] sm:$0xff]
  %v110 = vld [vmem:[%s2 + $0x218] sm:$0xff]
  %v111 = vld [vmem:[%s2 + $0x220] sm:$0xff]
  %v112 = vld [vmem:[%s2 + $0x228] sm:$0xff]
  %v113 = vld [vmem:[%s2 + $0x230] sm:$0xff]
  %v114 = vld [vmem:[%s2 + $0x238] sm:$0xff]
  %v115 = vld [vmem:[%s2 + $0x240] sm:$0xff]
  %v116 = vld [vmem:[%s2 + $0x248] sm:$0xff]
  %v117 = vld [vmem:[%s2 + $0x250] sm:$0xff]
  %v118 = vld [vmem:[%s2 + $0x258] sm:$0xff]
  %v119 = vld [vmem:[%s2 + $0x260] sm:$0xff]
  %v120 = vld [vmem:[%s2 + $0x268] sm:$0xff]
  %v121 = vld [vmem:[%s2 + $0x270] sm:$0xff]
  %v122 = vld [vmem:[%s2 + $0x278] sm:$0xff]
  %v123 = vld [vmem:[%s2 + $0x280] sm:$0xff]
  %v124 = vld [vmem:[%s2 + $0x288] sm:$0xff]
  %v125 = vld [vmem:[%s2 + $0x290] sm:$0xff]
  %v126 = vld [vmem:[%s2 + $0x298] sm:$0xff]
  %v127 = vld [vmem:[%s2 + $0x2a0] sm:$0xff]
  %v128 = vld [vmem:[%s2 + $0x2a8] sm:$0xff]
  %v129 = vld [vmem:[%s2 + $0x2b0] sm:$0xff]
  %v130 = vld [vmem:[%s2 + $0x2b8] sm:$0xff]
  %v131 = vld [vmem:[%s2 + $0x2c0] sm:$0xff]
  %v132 = vld [vmem:[%s2 + $0x2c8] sm:$0xff]
  %v133 = vld [vmem:[%s2 + $0x2d0] sm:$0xff]
  %v134 = vld [vmem:[%s2 + $0x2d8] sm:$0xff]
  %v135 = vld [vmem:[%s2 + $0x2e0] sm:$0xff]
  %v136 = vld [vmem:[%s2 + $0x2e8] sm:$0xff]
  %v137 = vld [vmem:[%s2 + $0x2f0] sm:$0xff]
  %v138 = vld [vmem:[%s2 + $0x2f8] sm:$0xff]
  %v139 = vld [vmem:[%s2 + $0x300] sm:$0xff]
  %v140 = vld [vmem:[%s2 + $0x308] sm:$0xff]
  %v141 = vld [vmem:[%s2 + $0x310] sm:$0xff]
  %v142 = vld [vmem:[%s2 + $0x318] sm:$0xff]
  %v143 = vld [vmem:[%s2 + $0x320] sm:$0xff]
  %v144 = vld [vmem:[%s2 + $0x328] sm:$0xff]
  %v145 = vld [vmem:[%s2 + $0x330] sm:$0xff]
  %v146 = vld [vmem:[%s2 + $0x338] sm:$0xff]
  %v147 = vld [vmem:[%s2 + $0x340] sm:$0xff]
  %v148 = vld [vmem:[%s2 + $0x348] sm:$0xff]
  %v149 = vld [vmem:[%s2 + $0x350] sm:$0xff]
  %v150 = vld [vmem:[%s2 + $0x358] sm:$0xff]
  %v151 = vld [vmem:[%s2 + $0x360] sm:$0xff]
  %v152 = vld [vmem:[%s2 + $0x368] sm:$0xff]
  %v153 = vld [vmem:[%s2 + $0x370] sm:$0xff]
  %v154 = vld [vmem:[%s2 + $0x378] sm:$0xff]
  %v155 = vld [vmem:[%s2 + $0x380] sm:$0xff]
  %v156 = vld [vmem:[%s2 + $0x388] sm:$0xff]
  %v157 = vld [vmem:[%s2 + $0x390] sm:$0xff]
  %v158 = vld [vmem:[%s2 + $0x398] sm:$0xff]
  %v159 = vld [vmem:[%s2 + $0x3a0] sm:$0xff]
  %v160 = vld [vmem:[%s2 + $0x3a8] sm:$0xff]
  %v161 = vld [vmem:[%s2 + $0x3b0] sm:$0xff]
  %v162 = vld [vmem:[%s2 + $0x3b8] sm:$0xff]
  %v163 = vld [vmem:[%s2 + $0x3c0] sm:$0xff]
  %v164 = vld [vmem:[%s2 + $0x3c8] sm:$0xff]
  %v165 = vld [vmem:[%s2 + $0x3d0] sm:$0xff]
  %v166 = vld [vmem:[%s2 + $0x3d8] sm:$0xff]
  %v167 = vld [vmem:[%s2 + $0x3e0] sm:$0xff]
  %v168 = vld [vmem:[%s2 + $0x3e8] sm:$0xff]
  %v169 = vld [vmem:[%s2 + $0x3f0] sm:$0xff]
  %v170 = vld [vmem:[%s2 + $0x3f8] sm:$0xff]
  %v171 = vld [vmem:[%s2 + $0x400] sm:$0xff]
  %v172 = vld [vmem:[%s2 + $0x408] sm:$0xff]
  %v173 = vld [vmem:[%s2 + $0x410] sm:$0xff]
  %v174 = vld [vmem:[%s2 + $0x418] sm:$0xff]
  %v175 = vld [vmem:[%s2 + $0x420] sm:$0xff]
  %v176 = vld [vmem:[%s2 + $0x428] sm:$0xff]
  %v177 = vld [vmem:[%s2 + $0x430] sm:$0xff]
  %v178 = vld [vmem:[%s2 + $0x438] sm:$0xff]
  %v179 = vld [vmem:[%s2 + $0x440] sm:$0xff]
  %v180 = vld [vmem:[%s2 + $0x448] sm:$0xff]
  %v181 = vld [vmem:[%s2 + $0x450] sm:$0xff]
  %v182 = vld [vmem:[%s2 + $0x458] sm:$0xff]
  %v183 = vld [vmem:[%s2 + $0x460] sm:$0xff]
  %v184 = vld [vmem:[%s2 + $0x468] sm:$0xff]
  %v185 = vld [vmem:[%s2 + $0x470] sm:$0xff]
  %v186 = vld [vmem:[%s2 + $0x478] sm:$0xff]
  %v187 = vld [vmem:[%s2 + $0x480] sm:$0xff]
  %v188 = vld [vmem:[%s2 + $0x488] sm:$0xff]
  %v189 = vld [vmem:[%s2 + $0x490] sm:$0xff]
  %v190 = vld [vmem:[%s2 + $0x498] sm:$0xff]
  %v191 = vld [vmem:[%s2 + $0x4a0] sm:$0xff]
  %v192 = vld [vmem:[%s2 + $0x4a8] sm:$0xff]
  %v193 = vld [vmem:[%s2 + $0x4b0] sm:$0xff]
  %v194 = vld [vmem:[%s2 + $0x4b8] sm:$0xff]
  %v195 = vld [vmem:[%s2 + $0x4c0] sm:$0xff]
  %v196 = vld [vmem:[%s2 + $0x4c8] sm:$0xff]
  %v197 = vld [vmem:[%s2 + $0x4d0] sm:$0xff]
  %v198 = vld [vmem:[%s2 + $0x4d8] sm:$0xff]
  %v199 = vld [vmem:[%s2 + $0x4e0] sm:$0xff]
  %v200 = vld [vmem:[%s2 + $0x4e8] sm:$0xff]
  %v201 = vld [vmem:[%s2 + $0x4f0] sm:$0xff]
  %v202 = vld [vmem:[%s2 + $0x4f8] sm:$0xff]
  %v203 = vld [vmem:[%s2 + $0x500] sm:$0xff]
  %v204 = vld [vmem:[%s2 + $0x508] sm:$0xff]
  %v205 = vld [vmem:[%s2 + $0x510] sm:$0xff]
  %v206 = vld [vmem:[%s2 + $0x518] sm:$0xff]
  %v207 = vld [vmem:[%s2 + $0x520] sm:$0xff]
  %v208 = vld [vmem:[%s2 + $0x528] sm:$0xff]
  %v209 = vld [vmem:[%s2 + $0x530] sm:$0xff]
  %v210 = vld [vmem:[%s2 + $0x538] sm:$0xff]
  %v211 = vld [vmem:[%s2 + $0x540] sm:$0xff]
  %v212 = vld [vmem:[%s2 + $0x548] sm:$0xff]
  %v213 = vld [vmem:[%s2 + $0x550] sm:$0xff]
  %v214 = vld [vmem:[%s2 + $0x558] sm:$0xff]
  %v215 = vld [vmem:[%s2 + $0x560] sm:$0xff]
  %v216 = vld [vmem:[%s2 + $0x568] sm:$0xff]
  %v217 = vld [vmem:[%s2 + $0x570] sm:$0xff]
  %v218 = vld [vmem:[%s2 + $0x578] sm:$0xff]
  %v219 = vld [vmem:[%s2 + $0x580] sm:$0xff]
  %v220 = vld [vmem:[%s2 + $0x588] sm:$0xff]
  %v221 = vld [vmem:[%s2 + $0x590] sm:$0xff]
  %v222 = vld [vmem:[%s2 + $0x598] sm:$0xff]
  %v223 = vld [vmem:[%s2 + $0x5a0] sm:$0xff]
  %v224 = vld [vmem:[%s2 + $0x5a8] sm:$0xff]
  %v225 = vld [vmem:[%s2 + $0x5b0] sm:$0xff]
  %v226 = vld [vmem:[%s2 + $0x5b8] sm:$0xff]
  %v227 = vld [vmem:[%s2 + $0x5c0] sm:$0xff]
  %v228 = vld [vmem:[%s2 + $0x5c8] sm:$0xff]
  %v229 = vld [vmem:[%s2 + $0x5d0] sm:$0xff]
  %v230 = vld [vmem:[%s2 + $0x5d8] sm:$0xff]
  %v231 = vld [vmem:[%s2 + $0x5e0] sm:$0xff]
  %v232 = vld [vmem:[%s2 + $0x5e8] sm:$0xff]
  %v233 = vld [vmem:[%s2 + $0x5f0] sm:$0xff]
  %v234 = vld [vmem:[%s2 + $0x5f8] sm:$0xff]
  %v235 = vld [vmem:[%s2 + $0x600] sm:$0xff]
  %v236 = vld [vmem:[%s2 + $0x608] sm:$0xff]
  %v237 = vld [vmem:[%s2 + $0x610] sm:$0xff]
  %v238 = vld [vmem:[%s2 + $0x618] sm:$0xff]
  %v239 = vld [vmem:[%s2 + $0x620] sm:$0xff]
  %v240 = vld [vmem:[%s2 + $0x628] sm:$0xff]
  %v241 = vld [vmem:[%s2 + $0x630] sm:$0xff]
  %v242 = vld [vmem:[%s2 + $0x638] sm:$0xff]
  %v243 = vld [vmem:[%s2 + $0x640] sm:$0xff]
  %v244 = vld [vmem:[%s2 + $0x648] sm:$0xff]
  %v245 = vld [vmem:[%s2 + $0x650] sm:$0xff]
  %v246 = vld [vmem:[%s2 + $0x658] sm:$0xff]
  %v247 = vld [vmem:[%s2 + $0x660] sm:$0xff]
  %v248 = vld [vmem:[%s2 + $0x668] sm:$0xff]
  %v249 = vld [vmem:[%s2 + $0x670] sm:$0xff]
  %v250 = vld [vmem:[%s2 + $0x678] sm:$0xff]
  %v251 = vld [vmem:[%s2 + $0x680] sm:$0xff]
  %v252 = vld [vmem:[%s2 + $0x688] sm:$0xff]
  %v253 = vld [vmem:[%s2 + $0x690] sm:$0xff]
  %v254 = vld [vmem:[%s2 + $0x698] sm:$0xff]
  %v255 = vld [vmem:[%s2 + $0x6a0] sm:$0xff]
  %v256 = vld [vmem:[%s2 + $0x6a8] sm:$0xff]
  %v257 = vld [vmem:[%s2 + $0x6b0] sm:$0xff]
  %v258 = vld [vmem:[%s2 + $0x6b8] sm:$0xff]
  %v259 = vld [vmem:[%s2 + $0x6c0] sm:$0xff]
  %v260 = vld [vmem:[%s2 + $0x6c8] sm:$0xff]
  %v261 = vld [vmem:[%s2 + $0x6d0] sm:$0xff]
  %v262 = vld [vmem:[%s2 + $0x6d8] sm:$0xff]
  %v263 = vld [vmem:[%s2 + $0x6e0] sm:$0xff]
  %v264 = vld [vmem:[%s2 + $0x6e8] sm:$0xff]
  %v265 = vld [vmem:[%s2 + $0x6f0] sm:$0xff]
  %v266 = vld [vmem:[%s2 + $0x6f8] sm:$0xff]
  %v267 = vld [vmem:[%s2 + $0x700] sm:$0xff]
  %v268 = vld [vmem:[%s2 + $0x708] sm:$0xff]
  %v269 = vld [vmem:[%s2 + $0x710] sm:$0xff]
  %v270 = vld [vmem:[%s2 + $0x718] sm:$0xff]
  %v271 = vld [vmem:[%s2 + $0x720] sm:$0xff]
  %v272 = vld [vmem:[%s2 + $0x728] sm:$0xff]
  %v273 = vld [vmem:[%s2 + $0x730] sm:$0xff]
  %v274 = vld [vmem:[%s2 + $0x738] sm:$0xff]
  %v275 = vld [vmem:[%s2 + $0x740] sm:$0xff]
  %v276 = vld [vmem:[%s2 + $0x748] sm:$0xff]
  %v277 = vld [vmem:[%s2 + $0x750] sm:$0xff]
  %v278 = vld [vmem:[%s2 + $0x758] sm:$0xff]
  %v279 = vld [vmem:[%s2 + $0x760] sm:$0xff]
  %v280 = vld [vmem:[%s2 + $0x768] sm:$0xff]
  %v281 = vld [vmem:[%s2 + $0x770] sm:$0xff]
  %v282 = vld [vmem:[%s2 + $0x778] sm:$0xff]
  %v283 = vld [vmem:[%s2 + $0x780] sm:$0xff]
  %v284 = vld [vmem:[%s2 + $0x788] sm:$0xff]
  %v285 = vld [vmem:[%s2 + $0x790] sm:$0xff]
  %v286 = vld [vmem:[%s2 + $0x798] sm:$0xff]
  %v287 = vld [vmem:[%s2 + $0x7a0] sm:$0xff]
  %v288 = vld [vmem:[%s2 + $0x7a8] sm:$0xff]
  %v289 = vld [vmem:[%s2 + $0x7b0] sm:$0xff]
  %v290 = vld [vmem:[%s2 + $0x7b8] sm:$0xff]
  %v291 = vld [vmem:[%s2 + $0x7c0] sm:$0xff]
  %v292 = vld [vmem:[%s2 + $0x7c8] sm:$0xff]
  %v293 = vld [vmem:[%s2 + $0x7d0] sm:$0xff]
  %v294 = vld [vmem:[%s2 + $0x7d8] sm:$0xff]
  %v295 = vld [vmem:[%s2 + $0x7e0] sm:$0xff]
  %v296 = vld [vmem:[%s2 + $0x7e8] sm:$0xff]
  %v297 = vld [vmem:[%s2 + $0x7f0] sm:$0xff]
  %v298 = vld [vmem:[%s2 + $0x7f8] sm:$0xff]
  %v299 = vld [vmem:[%s2 + $0x800] sm:$0xff]
  %v300 = vld [vmem:[%s2 + $0x808] sm:$0xff]
  %v301 = vld [vmem:[%s2 + $0x810] sm:$0xff]
  %v302 = vld [vmem:[%s2 + $0x818] sm:$0xff]
  %v303 = vld [vmem:[%s2 + $0x820] sm:$0xff]
  %v304 = vld [vmem:[%s2 + $0x828] sm:$0xff]
  %v305 = vld [vmem:[%s2 + $0x830] sm:$0xff]
  %v306 = vld [vmem:[%s2 + $0x838] sm:$0xff]
  %v307 = vld [vmem:[%s2 + $0x840] sm:$0xff]
  %v308 = vld [vmem:[%s2 + $0x848] sm:$0xff]
  %v309 = vld [vmem:[%s2 + $0x850] sm:$0xff]
  %v310 = vld [vmem:[%s2 + $0x858] sm:$0xff]
  %v311 = vld [vmem:[%s2 + $0x860] sm:$0xff]
  %v312 = vld [vmem:[%s2 + $0x868] sm:$0xff]
  %v313 = vld [vmem:[%s2 + $0x870] sm:$0xff]
  %v314 = vld [vmem:[%s2 + $0x878] sm:$0xff]
  %v315 = vld [vmem:[%s2 + $0x880] sm:$0xff]
  %v316 = vld [vmem:[%s2 + $0x888] sm:$0xff]
  %v317 = vld [vmem:[%s2 + $0x890] sm:$0xff]
  %v318 = vld [vmem:[%s2 + $0x898] sm:$0xff]
  %v319 = vld [vmem:[%s2 + $0x8a0] sm:$0xff]
  %v320 = vld [vmem:[%s2 + $0x8a8] sm:$0xff]
  %v321 = vld [vmem:[%s2 + $0x8b0] sm:$0xff]
  %v322 = vld [vmem:[%s2 + $0x8b8] sm:$0xff]
  %v323 = vld [vmem:[%s2 + $0x8c0] sm:$0xff]
  %v324 = vld [vmem:[%s2 + $0x8c8] sm:$0xff]
  %v325 = vld [vmem:[%s2 + $0x8d0] sm:$0xff]
  %v326 = vld [vmem:[%s2 + $0x8d8] sm:$0xff]
  %v327 = vld [vmem:[%s2 + $0x8e0] sm:$0xff]
  %v328 = vld [vmem:[%s2 + $0x8e8] sm:$0xff]
  %v329 = vld [vmem:[%s2 + $0x8f0] sm:$0xff]
  %v330 = vld [vmem:[%s2 + $0x8f8] sm:$0xff]
  %v331 = vld [vmem:[%s3] sm:$0x3f]
  %v332 = vld [vmem:[%s4] sm:$0xff]
  %v333 = vld [vmem:[%s4 + $0x8] sm:$0xff]
  %v334 = vld [vmem:[%s4 + $0x10] sm:$0xff]
  %v335 = vld [vmem:[%s4 + $0x18] sm:$0xff]
  %v336 = vld [vmem:[%s4 + $0x20] sm:$0xff]
  %v337 = vld [vmem:[%s4 + $0x28] sm:$0xff]
  %v338 = vld [vmem:[%s4 + $0x30] sm:$0xff]
  %v339 = vld [vmem:[%s4 + $0x38] sm:$0xff]
  %v340 = vld [vmem:[%s4 + $0x40] sm:$0xff]
  %v341 = vld [vmem:[%s4 + $0x48] sm:$0xff]
  %v342 = vld [vmem:[%s4 + $0x50] sm:$0xff]
  %v343 = vld [vmem:[%s4 + $0x58] sm:$0xff]
  %v344 = vld [vmem:[%s4 + $0x60] sm:$0xff]
  %v345 = vld [vmem:[%s4 + $0x68] sm:$0xff]
  %v346 = vld [vmem:[%s4 + $0x70] sm:$0xff]
  %v347 = vld [vmem:[%s4 + $0x78] sm:$0xff]
  %v348 = vld [vmem:[%s4 + $0x80] sm:$0xff]
  %v349 = vld [vmem:[%s4 + $0x88] sm:$0xff]
  %v350 = vld [vmem:[%s4 + $0x90] sm:$0xff]
  %v351 = vld [vmem:[%s4 + $0x98] sm:$0xff]
  %v352 = vld [vmem:[%s4 + $0xa0] sm:$0xff]
  %v353 = vld [vmem:[%s4 + $0xa8] sm:$0xff]
  %v354 = vld [vmem:[%s4 + $0xb0] sm:$0xff]
  %v355 = vld [vmem:[%s4 + $0xb8] sm:$0xff]
  %v356 = vld [vmem:[%s4 + $0xc0] sm:$0xff]
  %v357 = vld [vmem:[%s4 + $0xc8] sm:$0xff]
  %v358 = vld [vmem:[%s4 + $0xd0] sm:$0xff]
  %v359 = vld [vmem:[%s4 + $0xd8] sm:$0xff]
  %v360 = vld [vmem:[%s4 + $0xe0] sm:$0xff]
  %v361 = vld [vmem:[%s4 + $0xe8] sm:$0xff]
  %v362 = vld [vmem:[%s4 + $0xf0] sm:$0xff]
  %v363 = vld [vmem:[%s4 + $0xf8] sm:$0xff]
  %v364 = vld [vmem:[%s4 + $0x100] sm:$0xff]
  %v365 = vld [vmem:[%s4 + $0x108] sm:$0xff]
  %v366 = vld [vmem:[%s4 + $0x110] sm:$0xff]
  %v367 = vld [vmem:[%s4 + $0x118] sm:$0xff]
  %v368 = vld [vmem:[%s4 + $0x120] sm:$0xff]
  %v369 = vld [vmem:[%s4 + $0x128] sm:$0xff]
  %v370 = vld [vmem:[%s4 + $0x130] sm:$0xff]
  %v371 = vld [vmem:[%s4 + $0x138] sm:$0xff]
  %v372 = vld [vmem:[%s4 + $0x140] sm:$0xff]
  %v373 = vld [vmem:[%s4 + $0x148] sm:$0xff]
  %v374 = vld [vmem:[%s4 + $0x150] sm:$0xff]
  %v375 = vld [vmem:[%s4 + $0x158] sm:$0xff]
  %v376 = vld [vmem:[%s4 + $0x160] sm:$0xff]
  %v377 = vld [vmem:[%s4 + $0x168] sm:$0xff]
  %v378 = vld [vmem:[%s4 + $0x170] sm:$0xff]
  %v379 = vld [vmem:[%s4 + $0x178] sm:$0xff]
  %v380 = vld [vmem:[%s4 + $0x180] sm:$0xff]
  %v381 = vld [vmem:[%s4 + $0x188] sm:$0xff]
  %v382 = vld [vmem:[%s4 + $0x190] sm:$0xff]
  %v383 = vld [vmem:[%s4 + $0x198] sm:$0xff]
  %v384 = vld [vmem:[%s4 + $0x1a0] sm:$0xff]
  %v385 = vld [vmem:[%s4 + $0x1a8] sm:$0xff]
  %v386 = vld [vmem:[%s4 + $0x1b0] sm:$0xff]
  %v387 = vld [vmem:[%s4 + $0x1b8] sm:$0xff]
  %v388 = vld [vmem:[%s4 + $0x1c0] sm:$0xff]
  %v389 = vld [vmem:[%s4 + $0x1c8] sm:$0xff]
  %v390 = vld [vmem:[%s4 + $0x1d0] sm:$0xff]
  %v391 = vld [vmem:[%s4 + $0x1d8] sm:$0xff]
  %v392 = vld [vmem:[%s4 + $0x1e0] sm:$0xff]
  %v393 = vld [vmem:[%s4 + $0x1e8] sm:$0xff]
  %v394 = vld [vmem:[%s4 + $0x1f0] sm:$0xff]
  %v395 = vld [vmem:[%s4 + $0x1f8] sm:$0xff]
  %v396 = vld [vmem:[%s4 + $0x200] sm:$0xff]
  %v397 = vld [vmem:[%s4 + $0x208] sm:$0xff]
  %v398 = vld [vmem:[%s4 + $0x210] sm:$0xff]
  %v399 = vld [vmem:[%s4 + $0x218] sm:$0xff]
  %v400 = vld [vmem:[%s4 + $0x220] sm:$0xff]
  %v401 = vld [vmem:[%s4 + $0x228] sm:$0xff]
  %v402 = vld [vmem:[%s4 + $0x230] sm:$0xff]
  %v403 = vld [vmem:[%s4 + $0x238] sm:$0xff]
  %v404 = vld [vmem:[%s4 + $0x240] sm:$0xff]
  %v405 = vld [vmem:[%s4 + $0x248] sm:$0xff]
  %v406 = vld [vmem:[%s4 + $0x250] sm:$0xff]
  %v407 = vld [vmem:[%s4 + $0x258] sm:$0xff]
  %v408 = vld [vmem:[%s4 + $0x260] sm:$0xff]
  %v409 = vld [vmem:[%s4 + $0x268] sm:$0xff]
  %v410 = vld [vmem:[%s4 + $0x270] sm:$0xff]
  %v411 = vld [vmem:[%s4 + $0x278] sm:$0xff]
  %v412 = vld [vmem:[%s4 + $0x280] sm:$0xff]
  %v413 = vld [vmem:[%s4 + $0x288] sm:$0xff]
  %v414 = vld [vmem:[%s4 + $0x290] sm:$0xff]
  %v415 = vld [vmem:[%s4 + $0x298] sm:$0xff]
  %v416 = vld [vmem:[%s4 + $0x2a0] sm:$0xff]
  %v417 = vld [vmem:[%s4 + $0x2a8] sm:$0xff]
  %v418 = vld [vmem:[%s4 + $0x2b0] sm:$0xff]
  %v419 = vld [vmem:[%s4 + $0x2b8] sm:$0xff]
  %v420 = vld [vmem:[%s4 + $0x2c0] sm:$0xff]
  %v421 = vld [vmem:[%s4 + $0x2c8] sm:$0xff]
  %v422 = vld [vmem:[%s4 + $0x2d0] sm:$0xff]
  %v423 = vld [vmem:[%s4 + $0x2d8] sm:$0xff]
  %v424 = vld [vmem:[%s4 + $0x2e0] sm:$0xff]
  %v425 = vld [vmem:[%s4 + $0x2e8] sm:$0xff]
  %v426 = vld [vmem:[%s4 + $0x2f0] sm:$0xff]
  %v427 = vld [vmem:[%s4 + $0x2f8] sm:$0xff]
  %v428 = vld [vmem:[%s5] sm:$0x3]
  %v429 = vld [vmem:[%s6] sm:$0xf]
  %v430 = vld [vmem:[%s6 + $0x4] sm:$0xf]
  %v431 = vld [vmem:[%s6 + $0x8] sm:$0xf]
  %v432 = vld [vmem:[%s6 + $0xc] sm:$0xf]
  %v433 = vld [vmem:[%s6 + $0x10] sm:$0xf]
  %v434 = vld [vmem:[%s6 + $0x14] sm:$0xf]
  %v435 = vld [vmem:[%s6 + $0x18] sm:$0xf]
  %v436 = vld [vmem:[%s6 + $0x1c] sm:$0xf]
  %v437 = vld [vmem:[%s6 + $0x20] sm:$0xf]
  %v438 = vld [vmem:[%s6 + $0x24] sm:$0xf]
  %v439 = vld [vmem:[%s6 + $0x28] sm:$0xf]
  %v440 = vld [vmem:[%s6 + $0x2c] sm:$0xf]
  %v441 = vld [vmem:[%s6 + $0x30] sm:$0xf]
  %v442 = vld [vmem:[%s6 + $0x34] sm:$0xf]
  %v443 = vld [vmem:[%s6 + $0x38] sm:$0xf]
  %v444 = vld [vmem:[%s6 + $0x3c] sm:$0xf]
  %v445 = vld [vmem:[%s6 + $0x40] sm:$0xf]
  %v446 = vld [vmem:[%s6 + $0x44] sm:$0xf]
  %v447 = vld [vmem:[%s6 + $0x48] sm:$0xf]
  %v448 = vld [vmem:[%s6 + $0x4c] sm:$0xf]
  %v449 = vld [vmem:[%s6 + $0x50] sm:$0xf]
  %v450 = vld [vmem:[%s6 + $0x54] sm:$0xf]
  %v451 = vld [vmem:[%s6 + $0x58] sm:$0xf]
  %v452 = vld [vmem:[%s6 + $0x5c] sm:$0xf]
  %v453 = vld [vmem:[%s6 + $0x60] sm:$0xf]
  %v454 = vld [vmem:[%s6 + $0x64] sm:$0xf]
  %v455 = vld [vmem:[%s6 + $0x68] sm:$0xf]
  %v456 = vld [vmem:[%s6 + $0x6c] sm:$0xf]
  %v457 = vld [vmem:[%s6 + $0x70] sm:$0xf]
  %v458 = vld [vmem:[%s6 + $0x74] sm:$0xf]
  %v459 = vld [vmem:[%s6 + $0x78] sm:$0xf]
  %v460 = vld [vmem:[%s6 + $0x7c] sm:$0xf]
  %v461 = vld [vmem:[%s7] sm:$0x1]
  %v463 = vlaneseq
  %v464 = vshrl.u32 %v463, 7
  %v465 = vsub.s32 0, %v464
  %v466 = vrot.slane %v331, %v465
  %v467 = vlaneseq
  %v468 = vshrl.u32 %v467, 7
  %v469 = vsub.s32 1, %v468
  %v470 = vrot.slane %v331, %v469
  %v471 = vlaneseq
  %v472 = vshrl.u32 %v471, 7
  %v473 = vsub.s32 2, %v472
  %v474 = vrot.slane %v331, %v473
  %v475 = vlaneseq
  %v476 = vshrl.u32 %v475, 7
  %v477 = vsub.s32 3, %v476
  %v478 = vrot.slane %v331, %v477
  %v479 = vlaneseq
  %v480 = vshrl.u32 %v479, 7
  %v481 = vsub.s32 4, %v480
  %v482 = vrot.slane %v331, %v481
  %v483 = vlaneseq
  %v484 = vshrl.u32 %v483, 7
  %v485 = vsub.s32 5, %v484
  %v486 = vrot.slane %v331, %v485
  %v505 = vunpack.c.l.b16 %v30
  %v506 = vunpack.c.h.b16 %v30
  %v507 = vunpack.c.l.b16 %v31
  %v508 = vunpack.c.h.b16 %v31
  %v509 = vunpack.c.l.b16 %v32
  %v510 = vunpack.c.h.b16 %v32
  %v511 = vunpack.c.l.b16 %v33
  %v512 = vunpack.c.h.b16 %v33
  %v513 = vunpack.c.l.b16 %v34
  %v514 = vunpack.c.h.b16 %v34
  %v515 = vunpack.c.l.b16 %v35
  %v516 = vunpack.c.h.b16 %v35
  %v517 = vunpack.c.l.b16 %v36
  %v518 = vunpack.c.h.b16 %v36
  %v519 = vunpack.c.l.b16 %v37
  %v520 = vunpack.c.h.b16 %v37
  %v521 = vunpack.c.l.b16 %v38
  %v522 = vunpack.c.h.b16 %v38
  %v523 = vunpack.c.l.b16 %v39
  %v524 = vunpack.c.h.b16 %v39
  %v525 = vunpack.c.l.b16 %v40
  %v526 = vunpack.c.h.b16 %v40
  %v527 = vunpack.c.l.b16 %v41
  %v528 = vunpack.c.h.b16 %v41
  %v529 = vpack.c.b16 %v511, %v505
  %v530 = vpack.c.b16 %v512, %v506
  %v531 = vpack.c.b16 %v513, %v507
  %v532 = vpack.c.b16 %v514, %v508
  %v533 = vpack.c.b16 %v515, %v509
  %v534 = vpack.c.b16 %v516, %v510
  %v535 = vpack.c.b16 %v523, %v517
  %v536 = vpack.c.b16 %v524, %v518
  %v537 = vpack.c.b16 %v525, %v519
  %v538 = vpack.c.b16 %v526, %v520
  %v539 = vpack.c.b16 %v527, %v521
  %v540 = vpack.c.b16 %v528, %v522
  %v841 = vunpack.c.l.b16 %v43
  %v842 = vunpack.c.h.b16 %v43
  %v843 = vunpack.c.l.b16 %v44
  %v844 = vunpack.c.h.b16 %v44
  %v845 = vunpack.c.l.b16 %v45
  %v846 = vunpack.c.h.b16 %v45
  %v847 = vunpack.c.l.b16 %v46
  %v848 = vunpack.c.h.b16 %v46
  %v849 = vunpack.c.l.b16 %v47
  %v850 = vunpack.c.h.b16 %v47
  %v851 = vunpack.c.l.b16 %v48
  %v852 = vunpack.c.h.b16 %v48
  %v853 = vunpack.c.l.b16 %v49
  %v854 = vunpack.c.h.b16 %v49
  %v855 = vunpack.c.l.b16 %v50
  %v856 = vunpack.c.h.b16 %v50
  %v857 = vunpack.c.l.b16 %v51
  %v858 = vunpack.c.h.b16 %v51
  %v859 = vunpack.c.l.b16 %v52
  %v860 = vunpack.c.h.b16 %v52
  %v861 = vunpack.c.l.b16 %v53
  %v862 = vunpack.c.h.b16 %v53
  %v863 = vunpack.c.l.b16 %v54
  %v864 = vunpack.c.h.b16 %v54
  %v865 = vunpack.c.l.b16 %v55
  %v866 = vunpack.c.h.b16 %v55
  %v867 = vunpack.c.l.b16 %v56
  %v868 = vunpack.c.h.b16 %v56
  %v869 = vunpack.c.l.b16 %v57
  %v870 = vunpack.c.h.b16 %v57
  %v871 = vunpack.c.l.b16 %v58
  %v872 = vunpack.c.h.b16 %v58
  %v873 = vunpack.c.l.b16 %v59
  %v874 = vunpack.c.h.b16 %v59
  %v875 = vunpack.c.l.b16 %v60
  %v876 = vunpack.c.h.b16 %v60
  %v877 = vunpack.c.l.b16 %v61
  %v878 = vunpack.c.h.b16 %v61
  %v879 = vunpack.c.l.b16 %v62
  %v880 = vunpack.c.h.b16 %v62
  %v881 = vunpack.c.l.b16 %v63
  %v882 = vunpack.c.h.b16 %v63
  %v883 = vunpack.c.l.b16 %v64
  %v884 = vunpack.c.h.b16 %v64
  %v885 = vunpack.c.l.b16 %v65
  %v886 = vunpack.c.h.b16 %v65
  %v887 = vunpack.c.l.b16 %v66
  %v888 = vunpack.c.h.b16 %v66
  %v889 = vunpack.c.l.b16 %v67
  %v890 = vunpack.c.h.b16 %v67
  %v891 = vunpack.c.l.b16 %v68
  %v892 = vunpack.c.h.b16 %v68
  %v893 = vunpack.c.l.b16 %v69
  %v894 = vunpack.c.h.b16 %v69
  %v895 = vunpack.c.l.b16 %v70
  %v896 = vunpack.c.h.b16 %v70
  %v897 = vunpack.c.l.b16 %v71
  %v898 = vunpack.c.h.b16 %v71
  %v899 = vunpack.c.l.b16 %v72
  %v900 = vunpack.c.h.b16 %v72
  %v901 = vunpack.c.l.b16 %v73
  %v902 = vunpack.c.h.b16 %v73
  %v903 = vunpack.c.l.b16 %v74
  %v904 = vunpack.c.h.b16 %v74
  %v905 = vunpack.c.l.b16 %v75
  %v906 = vunpack.c.h.b16 %v75
  %v907 = vunpack.c.l.b16 %v76
  %v908 = vunpack.c.h.b16 %v76
  %v909 = vunpack.c.l.b16 %v77
  %v910 = vunpack.c.h.b16 %v77
  %v911 = vunpack.c.l.b16 %v78
  %v912 = vunpack.c.h.b16 %v78
  %v913 = vunpack.c.l.b16 %v79
  %v914 = vunpack.c.h.b16 %v79
  %v915 = vunpack.c.l.b16 %v80
  %v916 = vunpack.c.h.b16 %v80
  %v917 = vunpack.c.l.b16 %v81
  %v918 = vunpack.c.h.b16 %v81
  %v919 = vunpack.c.l.b16 %v82
  %v920 = vunpack.c.h.b16 %v82
  %v921 = vunpack.c.l.b16 %v83
  %v922 = vunpack.c.h.b16 %v83
  %v923 = vunpack.c.l.b16 %v84
  %v924 = vunpack.c.h.b16 %v84
  %v925 = vunpack.c.l.b16 %v85
  %v926 = vunpack.c.h.b16 %v85
  %v927 = vunpack.c.l.b16 %v86
  %v928 = vunpack.c.h.b16 %v86
  %v929 = vunpack.c.l.b16 %v87
  %v930 = vunpack.c.h.b16 %v87
  %v931 = vunpack.c.l.b16 %v88
  %v932 = vunpack.c.h.b16 %v88
  %v933 = vunpack.c.l.b16 %v89
  %v934 = vunpack.c.h.b16 %v89
  %v935 = vunpack.c.l.b16 %v90
  %v936 = vunpack.c.h.b16 %v90
  %v937 = vunpack.c.l.b16 %v91
  %v938 = vunpack.c.h.b16 %v91
  %v939 = vunpack.c.l.b16 %v92
  %v940 = vunpack.c.h.b16 %v92
  %v941 = vunpack.c.l.b16 %v93
  %v942 = vunpack.c.h.b16 %v93
  %v943 = vunpack.c.l.b16 %v94
  %v944 = vunpack.c.h.b16 %v94
  %v945 = vunpack.c.l.b16 %v95
  %v946 = vunpack.c.h.b16 %v95
  %v947 = vunpack.c.l.b16 %v96
  %v948 = vunpack.c.h.b16 %v96
  %v949 = vunpack.c.l.b16 %v97
  %v950 = vunpack.c.h.b16 %v97
  %v951 = vunpack.c.l.b16 %v98
  %v952 = vunpack.c.h.b16 %v98
  %v953 = vunpack.c.l.b16 %v99
  %v954 = vunpack.c.h.b16 %v99
  %v955 = vunpack.c.l.b16 %v100
  %v956 = vunpack.c.h.b16 %v100
  %v957 = vunpack.c.l.b16 %v101
  %v958 = vunpack.c.h.b16 %v101
  %v959 = vunpack.c.l.b16 %v102
  %v960 = vunpack.c.h.b16 %v102
  %v961 = vunpack.c.l.b16 %v103
  %v962 = vunpack.c.h.b16 %v103
  %v963 = vunpack.c.l.b16 %v104
  %v964 = vunpack.c.h.b16 %v104
  %v965 = vunpack.c.l.b16 %v105
  %v966 = vunpack.c.h.b16 %v105
  %v967 = vunpack.c.l.b16 %v106
  %v968 = vunpack.c.h.b16 %v106
  %v969 = vunpack.c.l.b16 %v107
  %v970 = vunpack.c.h.b16 %v107
  %v971 = vunpack.c.l.b16 %v108
  %v972 = vunpack.c.h.b16 %v108
  %v973 = vunpack.c.l.b16 %v109
  %v974 = vunpack.c.h.b16 %v109
  %v975 = vunpack.c.l.b16 %v110
  %v976 = vunpack.c.h.b16 %v110
  %v977 = vunpack.c.l.b16 %v111
  %v978 = vunpack.c.h.b16 %v111
  %v979 = vunpack.c.l.b16 %v112
  %v980 = vunpack.c.h.b16 %v112
  %v981 = vunpack.c.l.b16 %v113
  %v982 = vunpack.c.h.b16 %v113
  %v983 = vunpack.c.l.b16 %v114
  %v984 = vunpack.c.h.b16 %v114
  %v985 = vunpack.c.l.b16 %v115
  %v986 = vunpack.c.h.b16 %v115
  %v987 = vunpack.c.l.b16 %v116
  %v988 = vunpack.c.h.b16 %v116
  %v989 = vunpack.c.l.b16 %v117
  %v990 = vunpack.c.h.b16 %v117
  %v991 = vunpack.c.l.b16 %v118
  %v992 = vunpack.c.h.b16 %v118
  %v993 = vunpack.c.l.b16 %v119
  %v994 = vunpack.c.h.b16 %v119
  %v995 = vunpack.c.l.b16 %v120
  %v996 = vunpack.c.h.b16 %v120
  %v997 = vunpack.c.l.b16 %v121
  %v998 = vunpack.c.h.b16 %v121
  %v999 = vunpack.c.l.b16 %v122
  %v1000 = vunpack.c.h.b16 %v122
  %v1001 = vunpack.c.l.b16 %v123
  %v1002 = vunpack.c.h.b16 %v123
  %v1003 = vunpack.c.l.b16 %v124
  %v1004 = vunpack.c.h.b16 %v124
  %v1005 = vunpack.c.l.b16 %v125
  %v1006 = vunpack.c.h.b16 %v125
  %v1007 = vunpack.c.l.b16 %v126
  %v1008 = vunpack.c.h.b16 %v126
  %v1009 = vunpack.c.l.b16 %v127
  %v1010 = vunpack.c.h.b16 %v127
  %v1011 = vunpack.c.l.b16 %v128
  %v1012 = vunpack.c.h.b16 %v128
  %v1013 = vunpack.c.l.b16 %v129
  %v1014 = vunpack.c.h.b16 %v129
  %v1015 = vunpack.c.l.b16 %v130
  %v1016 = vunpack.c.h.b16 %v130
  %v1017 = vunpack.c.l.b16 %v131
  %v1018 = vunpack.c.h.b16 %v131
  %v1019 = vunpack.c.l.b16 %v132
  %v1020 = vunpack.c.h.b16 %v132
  %v1021 = vunpack.c.l.b16 %v133
  %v1022 = vunpack.c.h.b16 %v133
  %v1023 = vunpack.c.l.b16 %v134
  %v1024 = vunpack.c.h.b16 %v134
  %v1025 = vunpack.c.l.b16 %v135
  %v1026 = vunpack.c.h.b16 %v135
  %v1027 = vunpack.c.l.b16 %v136
  %v1028 = vunpack.c.h.b16 %v136
  %v1029 = vunpack.c.l.b16 %v137
  %v1030 = vunpack.c.h.b16 %v137
  %v1031 = vunpack.c.l.b16 %v138
  %v1032 = vunpack.c.h.b16 %v138
  %v1033 = vunpack.c.l.b16 %v139
  %v1034 = vunpack.c.h.b16 %v139
  %v1035 = vunpack.c.l.b16 %v140
  %v1036 = vunpack.c.h.b16 %v140
  %v1037 = vunpack.c.l.b16 %v141
  %v1038 = vunpack.c.h.b16 %v141
  %v1039 = vunpack.c.l.b16 %v142
  %v1040 = vunpack.c.h.b16 %v142
  %v1041 = vunpack.c.l.b16 %v143
  %v1042 = vunpack.c.h.b16 %v143
  %v1043 = vunpack.c.l.b16 %v144
  %v1044 = vunpack.c.h.b16 %v144
  %v1045 = vunpack.c.l.b16 %v145
  %v1046 = vunpack.c.h.b16 %v145
  %v1047 = vunpack.c.l.b16 %v146
  %v1048 = vunpack.c.h.b16 %v146
  %v1049 = vunpack.c.l.b16 %v147
  %v1050 = vunpack.c.h.b16 %v147
  %v1051 = vunpack.c.l.b16 %v148
  %v1052 = vunpack.c.h.b16 %v148
  %v1053 = vunpack.c.l.b16 %v149
  %v1054 = vunpack.c.h.b16 %v149
  %v1055 = vunpack.c.l.b16 %v150
  %v1056 = vunpack.c.h.b16 %v150
  %v1057 = vunpack.c.l.b16 %v151
  %v1058 = vunpack.c.h.b16 %v151
  %v1059 = vunpack.c.l.b16 %v152
  %v1060 = vunpack.c.h.b16 %v152
  %v1061 = vunpack.c.l.b16 %v153
  %v1062 = vunpack.c.h.b16 %v153
  %v1063 = vunpack.c.l.b16 %v154
  %v1064 = vunpack.c.h.b16 %v154
  %v1065 = vunpack.c.l.b16 %v155
  %v1066 = vunpack.c.h.b16 %v155
  %v1067 = vunpack.c.l.b16 %v156
  %v1068 = vunpack.c.h.b16 %v156
  %v1069 = vunpack.c.l.b16 %v157
  %v1070 = vunpack.c.h.b16 %v157
  %v1071 = vunpack.c.l.b16 %v158
  %v1072 = vunpack.c.h.b16 %v158
  %v1073 = vunpack.c.l.b16 %v159
  %v1074 = vunpack.c.h.b16 %v159
  %v1075 = vunpack.c.l.b16 %v160
  %v1076 = vunpack.c.h.b16 %v160
  %v1077 = vunpack.c.l.b16 %v161
  %v1078 = vunpack.c.h.b16 %v161
  %v1079 = vunpack.c.l.b16 %v162
  %v1080 = vunpack.c.h.b16 %v162
  %v1081 = vunpack.c.l.b16 %v163
  %v1082 = vunpack.c.h.b16 %v163
  %v1083 = vunpack.c.l.b16 %v164
  %v1084 = vunpack.c.h.b16 %v164
  %v1085 = vunpack.c.l.b16 %v165
  %v1086 = vunpack.c.h.b16 %v165
  %v1087 = vunpack.c.l.b16 %v166
  %v1088 = vunpack.c.h.b16 %v166
  %v1089 = vunpack.c.l.b16 %v167
  %v1090 = vunpack.c.h.b16 %v167
  %v1091 = vunpack.c.l.b16 %v168
  %v1092 = vunpack.c.h.b16 %v168
  %v1093 = vunpack.c.l.b16 %v169
  %v1094 = vunpack.c.h.b16 %v169
  %v1095 = vunpack.c.l.b16 %v170
  %v1096 = vunpack.c.h.b16 %v170
  %v1097 = vunpack.c.l.b16 %v171
  %v1098 = vunpack.c.h.b16 %v171
  %v1099 = vunpack.c.l.b16 %v172
  %v1100 = vunpack.c.h.b16 %v172
  %v1101 = vunpack.c.l.b16 %v173
  %v1102 = vunpack.c.h.b16 %v173
  %v1103 = vunpack.c.l.b16 %v174
  %v1104 = vunpack.c.h.b16 %v174
  %v1105 = vunpack.c.l.b16 %v175
  %v1106 = vunpack.c.h.b16 %v175
  %v1107 = vunpack.c.l.b16 %v176
  %v1108 = vunpack.c.h.b16 %v176
  %v1109 = vunpack.c.l.b16 %v177
  %v1110 = vunpack.c.h.b16 %v177
  %v1111 = vunpack.c.l.b16 %v178
  %v1112 = vunpack.c.h.b16 %v178
  %v1113 = vunpack.c.l.b16 %v179
  %v1114 = vunpack.c.h.b16 %v179
  %v1115 = vunpack.c.l.b16 %v180
  %v1116 = vunpack.c.h.b16 %v180
  %v1117 = vunpack.c.l.b16 %v181
  %v1118 = vunpack.c.h.b16 %v181
  %v1119 = vunpack.c.l.b16 %v182
  %v1120 = vunpack.c.h.b16 %v182
  %v1121 = vunpack.c.l.b16 %v183
  %v1122 = vunpack.c.h.b16 %v183
  %v1123 = vunpack.c.l.b16 %v184
  %v1124 = vunpack.c.h.b16 %v184
  %v1125 = vunpack.c.l.b16 %v185
  %v1126 = vunpack.c.h.b16 %v185
  %v1127 = vunpack.c.l.b16 %v186
  %v1128 = vunpack.c.h.b16 %v186
  %v1129 = vunpack.c.l.b16 %v187
  %v1130 = vunpack.c.h.b16 %v187
  %v1131 = vunpack.c.l.b16 %v188
  %v1132 = vunpack.c.h.b16 %v188
  %v1133 = vunpack.c.l.b16 %v189
  %v1134 = vunpack.c.h.b16 %v189
  %v1135 = vunpack.c.l.b16 %v190
  %v1136 = vunpack.c.h.b16 %v190
  %v1137 = vunpack.c.l.b16 %v191
  %v1138 = vunpack.c.h.b16 %v191
  %v1139 = vunpack.c.l.b16 %v192
  %v1140 = vunpack.c.h.b16 %v192
  %v1141 = vunpack.c.l.b16 %v193
  %v1142 = vunpack.c.h.b16 %v193
  %v1143 = vunpack.c.l.b16 %v194
  %v1144 = vunpack.c.h.b16 %v194
  %v1145 = vunpack.c.l.b16 %v195
  %v1146 = vunpack.c.h.b16 %v195
  %v1147 = vunpack.c.l.b16 %v196
  %v1148 = vunpack.c.h.b16 %v196
  %v1149 = vunpack.c.l.b16 %v197
  %v1150 = vunpack.c.h.b16 %v197
  %v1151 = vunpack.c.l.b16 %v198
  %v1152 = vunpack.c.h.b16 %v198
  %v1153 = vunpack.c.l.b16 %v199
  %v1154 = vunpack.c.h.b16 %v199
  %v1155 = vunpack.c.l.b16 %v200
  %v1156 = vunpack.c.h.b16 %v200
  %v1157 = vunpack.c.l.b16 %v201
  %v1158 = vunpack.c.h.b16 %v201
  %v1159 = vunpack.c.l.b16 %v202
  %v1160 = vunpack.c.h.b16 %v202
  %v1161 = vunpack.c.l.b16 %v203
  %v1162 = vunpack.c.h.b16 %v203
  %v1163 = vunpack.c.l.b16 %v204
  %v1164 = vunpack.c.h.b16 %v204
  %v1165 = vunpack.c.l.b16 %v205
  %v1166 = vunpack.c.h.b16 %v205
  %v1167 = vunpack.c.l.b16 %v206
  %v1168 = vunpack.c.h.b16 %v206
  %v1169 = vunpack.c.l.b16 %v207
  %v1170 = vunpack.c.h.b16 %v207
  %v1171 = vunpack.c.l.b16 %v208
  %v1172 = vunpack.c.h.b16 %v208
  %v1173 = vunpack.c.l.b16 %v209
  %v1174 = vunpack.c.h.b16 %v209
  %v1175 = vunpack.c.l.b16 %v210
  %v1176 = vunpack.c.h.b16 %v210
  %v1177 = vunpack.c.l.b16 %v211
  %v1178 = vunpack.c.h.b16 %v211
  %v1179 = vunpack.c.l.b16 %v212
  %v1180 = vunpack.c.h.b16 %v212
  %v1181 = vunpack.c.l.b16 %v213
  %v1182 = vunpack.c.h.b16 %v213
  %v1183 = vunpack.c.l.b16 %v214
  %v1184 = vunpack.c.h.b16 %v214
  %v1185 = vunpack.c.l.b16 %v215
  %v1186 = vunpack.c.h.b16 %v215
  %v1187 = vunpack.c.l.b16 %v216
  %v1188 = vunpack.c.h.b16 %v216
  %v1189 = vunpack.c.l.b16 %v217
  %v1190 = vunpack.c.h.b16 %v217
  %v1191 = vunpack.c.l.b16 %v218
  %v1192 = vunpack.c.h.b16 %v218
  %v1193 = vunpack.c.l.b16 %v219
  %v1194 = vunpack.c.h.b16 %v219
  %v1195 = vunpack.c.l.b16 %v220
  %v1196 = vunpack.c.h.b16 %v220
  %v1197 = vunpack.c.l.b16 %v221
  %v1198 = vunpack.c.h.b16 %v221
  %v1199 = vunpack.c.l.b16 %v222
  %v1200 = vunpack.c.h.b16 %v222
  %v1201 = vunpack.c.l.b16 %v223
  %v1202 = vunpack.c.h.b16 %v223
  %v1203 = vunpack.c.l.b16 %v224
  %v1204 = vunpack.c.h.b16 %v224
  %v1205 = vunpack.c.l.b16 %v225
  %v1206 = vunpack.c.h.b16 %v225
  %v1207 = vunpack.c.l.b16 %v226
  %v1208 = vunpack.c.h.b16 %v226
  %v1209 = vunpack.c.l.b16 %v227
  %v1210 = vunpack.c.h.b16 %v227
  %v1211 = vunpack.c.l.b16 %v228
  %v1212 = vunpack.c.h.b16 %v228
  %v1213 = vunpack.c.l.b16 %v229
  %v1214 = vunpack.c.h.b16 %v229
  %v1215 = vunpack.c.l.b16 %v230
  %v1216 = vunpack.c.h.b16 %v230
  %v1217 = vunpack.c.l.b16 %v231
  %v1218 = vunpack.c.h.b16 %v231
  %v1219 = vunpack.c.l.b16 %v232
  %v1220 = vunpack.c.h.b16 %v232
  %v1221 = vunpack.c.l.b16 %v233
  %v1222 = vunpack.c.h.b16 %v233
  %v1223 = vunpack.c.l.b16 %v234
  %v1224 = vunpack.c.h.b16 %v234
  %v1225 = vunpack.c.l.b16 %v235
  %v1226 = vunpack.c.h.b16 %v235
  %v1227 = vunpack.c.l.b16 %v236
  %v1228 = vunpack.c.h.b16 %v236
  %v1229 = vunpack.c.l.b16 %v237
  %v1230 = vunpack.c.h.b16 %v237
  %v1231 = vunpack.c.l.b16 %v238
  %v1232 = vunpack.c.h.b16 %v238
  %v1233 = vunpack.c.l.b16 %v239
  %v1234 = vunpack.c.h.b16 %v239
  %v1235 = vunpack.c.l.b16 %v240
  %v1236 = vunpack.c.h.b16 %v240
  %v1237 = vunpack.c.l.b16 %v241
  %v1238 = vunpack.c.h.b16 %v241
  %v1239 = vunpack.c.l.b16 %v242
  %v1240 = vunpack.c.h.b16 %v242
  %v1241 = vunpack.c.l.b16 %v243
  %v1242 = vunpack.c.h.b16 %v243
  %v1243 = vunpack.c.l.b16 %v244
  %v1244 = vunpack.c.h.b16 %v244
  %v1245 = vunpack.c.l.b16 %v245
  %v1246 = vunpack.c.h.b16 %v245
  %v1247 = vunpack.c.l.b16 %v246
  %v1248 = vunpack.c.h.b16 %v246
  %v1249 = vunpack.c.l.b16 %v247
  %v1250 = vunpack.c.h.b16 %v247
  %v1251 = vunpack.c.l.b16 %v248
  %v1252 = vunpack.c.h.b16 %v248
  %v1253 = vunpack.c.l.b16 %v249
  %v1254 = vunpack.c.h.b16 %v249
  %v1255 = vunpack.c.l.b16 %v250
  %v1256 = vunpack.c.h.b16 %v250
  %v1257 = vunpack.c.l.b16 %v251
  %v1258 = vunpack.c.h.b16 %v251
  %v1259 = vunpack.c.l.b16 %v252
  %v1260 = vunpack.c.h.b16 %v252
  %v1261 = vunpack.c.l.b16 %v253
  %v1262 = vunpack.c.h.b16 %v253
  %v1263 = vunpack.c.l.b16 %v254
  %v1264 = vunpack.c.h.b16 %v254
  %v1265 = vunpack.c.l.b16 %v255
  %v1266 = vunpack.c.h.b16 %v255
  %v1267 = vunpack.c.l.b16 %v256
  %v1268 = vunpack.c.h.b16 %v256
  %v1269 = vunpack.c.l.b16 %v257
  %v1270 = vunpack.c.h.b16 %v257
  %v1271 = vunpack.c.l.b16 %v258
  %v1272 = vunpack.c.h.b16 %v258
  %v1273 = vunpack.c.l.b16 %v259
  %v1274 = vunpack.c.h.b16 %v259
  %v1275 = vunpack.c.l.b16 %v260
  %v1276 = vunpack.c.h.b16 %v260
  %v1277 = vunpack.c.l.b16 %v261
  %v1278 = vunpack.c.h.b16 %v261
  %v1279 = vunpack.c.l.b16 %v262
  %v1280 = vunpack.c.h.b16 %v262
  %v1281 = vunpack.c.l.b16 %v263
  %v1282 = vunpack.c.h.b16 %v263
  %v1283 = vunpack.c.l.b16 %v264
  %v1284 = vunpack.c.h.b16 %v264
  %v1285 = vunpack.c.l.b16 %v265
  %v1286 = vunpack.c.h.b16 %v265
  %v1287 = vunpack.c.l.b16 %v266
  %v1288 = vunpack.c.h.b16 %v266
  %v1289 = vunpack.c.l.b16 %v267
  %v1290 = vunpack.c.h.b16 %v267
  %v1291 = vunpack.c.l.b16 %v268
  %v1292 = vunpack.c.h.b16 %v268
  %v1293 = vunpack.c.l.b16 %v269
  %v1294 = vunpack.c.h.b16 %v269
  %v1295 = vunpack.c.l.b16 %v270
  %v1296 = vunpack.c.h.b16 %v270
  %v1297 = vunpack.c.l.b16 %v271
  %v1298 = vunpack.c.h.b16 %v271
  %v1299 = vunpack.c.l.b16 %v272
  %v1300 = vunpack.c.h.b16 %v272
  %v1301 = vunpack.c.l.b16 %v273
  %v1302 = vunpack.c.h.b16 %v273
  %v1303 = vunpack.c.l.b16 %v274
  %v1304 = vunpack.c.h.b16 %v274
  %v1305 = vunpack.c.l.b16 %v275
  %v1306 = vunpack.c.h.b16 %v275
  %v1307 = vunpack.c.l.b16 %v276
  %v1308 = vunpack.c.h.b16 %v276
  %v1309 = vunpack.c.l.b16 %v277
  %v1310 = vunpack.c.h.b16 %v277
  %v1311 = vunpack.c.l.b16 %v278
  %v1312 = vunpack.c.h.b16 %v278
  %v1313 = vunpack.c.l.b16 %v279
  %v1314 = vunpack.c.h.b16 %v279
  %v1315 = vunpack.c.l.b16 %v280
  %v1316 = vunpack.c.h.b16 %v280
  %v1317 = vunpack.c.l.b16 %v281
  %v1318 = vunpack.c.h.b16 %v281
  %v1319 = vunpack.c.l.b16 %v282
  %v1320 = vunpack.c.h.b16 %v282
  %v1321 = vunpack.c.l.b16 %v283
  %v1322 = vunpack.c.h.b16 %v283
  %v1323 = vunpack.c.l.b16 %v284
  %v1324 = vunpack.c.h.b16 %v284
  %v1325 = vunpack.c.l.b16 %v285
  %v1326 = vunpack.c.h.b16 %v285
  %v1327 = vunpack.c.l.b16 %v286
  %v1328 = vunpack.c.h.b16 %v286
  %v1329 = vunpack.c.l.b16 %v287
  %v1330 = vunpack.c.h.b16 %v287
  %v1331 = vunpack.c.l.b16 %v288
  %v1332 = vunpack.c.h.b16 %v288
  %v1333 = vunpack.c.l.b16 %v289
  %v1334 = vunpack.c.h.b16 %v289
  %v1335 = vunpack.c.l.b16 %v290
  %v1336 = vunpack.c.h.b16 %v290
  %v1337 = vunpack.c.l.b16 %v291
  %v1338 = vunpack.c.h.b16 %v291
  %v1339 = vunpack.c.l.b16 %v292
  %v1340 = vunpack.c.h.b16 %v292
  %v1341 = vunpack.c.l.b16 %v293
  %v1342 = vunpack.c.h.b16 %v293
  %v1343 = vunpack.c.l.b16 %v294
  %v1344 = vunpack.c.h.b16 %v294
  %v1345 = vunpack.c.l.b16 %v295
  %v1346 = vunpack.c.h.b16 %v295
  %v1347 = vunpack.c.l.b16 %v296
  %v1348 = vunpack.c.h.b16 %v296
  %v1349 = vunpack.c.l.b16 %v297
  %v1350 = vunpack.c.h.b16 %v297
  %v1351 = vunpack.c.l.b16 %v298
  %v1352 = vunpack.c.h.b16 %v298
  %v1353 = vunpack.c.l.b16 %v299
  %v1354 = vunpack.c.h.b16 %v299
  %v1355 = vunpack.c.l.b16 %v300
  %v1356 = vunpack.c.h.b16 %v300
  %v1357 = vunpack.c.l.b16 %v301
  %v1358 = vunpack.c.h.b16 %v301
  %v1359 = vunpack.c.l.b16 %v302
  %v1360 = vunpack.c.h.b16 %v302
  %v1361 = vunpack.c.l.b16 %v303
  %v1362 = vunpack.c.h.b16 %v303
  %v1363 = vunpack.c.l.b16 %v304
  %v1364 = vunpack.c.h.b16 %v304
  %v1365 = vunpack.c.l.b16 %v305
  %v1366 = vunpack.c.h.b16 %v305
  %v1367 = vunpack.c.l.b16 %v306
  %v1368 = vunpack.c.h.b16 %v306
  %v1369 = vunpack.c.l.b16 %v307
  %v1370 = vunpack.c.h.b16 %v307
  %v1371 = vunpack.c.l.b16 %v308
  %v1372 = vunpack.c.h.b16 %v308
  %v1373 = vunpack.c.l.b16 %v309
  %v1374 = vunpack.c.h.b16 %v309
  %v1375 = vunpack.c.l.b16 %v310
  %v1376 = vunpack.c.h.b16 %v310
  %v1377 = vunpack.c.l.b16 %v311
  %v1378 = vunpack.c.h.b16 %v311
  %v1379 = vunpack.c.l.b16 %v312
  %v1380 = vunpack.c.h.b16 %v312
  %v1381 = vunpack.c.l.b16 %v313
  %v1382 = vunpack.c.h.b16 %v313
  %v1383 = vunpack.c.l.b16 %v314
  %v1384 = vunpack.c.h.b16 %v314
  %v1385 = vunpack.c.l.b16 %v315
  %v1386 = vunpack.c.h.b16 %v315
  %v1387 = vunpack.c.l.b16 %v316
  %v1388 = vunpack.c.h.b16 %v316
  %v1389 = vunpack.c.l.b16 %v317
  %v1390 = vunpack.c.h.b16 %v317
  %v1391 = vunpack.c.l.b16 %v318
  %v1392 = vunpack.c.h.b16 %v318
  %v1393 = vunpack.c.l.b16 %v319
  %v1394 = vunpack.c.h.b16 %v319
  %v1395 = vunpack.c.l.b16 %v320
  %v1396 = vunpack.c.h.b16 %v320
  %v1397 = vunpack.c.l.b16 %v321
  %v1398 = vunpack.c.h.b16 %v321
  %v1399 = vunpack.c.l.b16 %v322
  %v1400 = vunpack.c.h.b16 %v322
  %v1401 = vunpack.c.l.b16 %v323
  %v1402 = vunpack.c.h.b16 %v323
  %v1403 = vunpack.c.l.b16 %v324
  %v1404 = vunpack.c.h.b16 %v324
  %v1405 = vunpack.c.l.b16 %v325
  %v1406 = vunpack.c.h.b16 %v325
  %v1407 = vunpack.c.l.b16 %v326
  %v1408 = vunpack.c.h.b16 %v326
  %v1409 = vunpack.c.l.b16 %v327
  %v1410 = vunpack.c.h.b16 %v327
  %v1411 = vunpack.c.l.b16 %v328
  %v1412 = vunpack.c.h.b16 %v328
  %v1413 = vunpack.c.l.b16 %v329
  %v1414 = vunpack.c.h.b16 %v329
  %v1415 = vunpack.c.l.b16 %v330
  %v1416 = vunpack.c.h.b16 %v330
  %v1417 = vpack.c.b16 %v847, %v841
  %v1418 = vpack.c.b16 %v848, %v842
  %v1419 = vpack.c.b16 %v849, %v843
  %v1420 = vpack.c.b16 %v850, %v844
  %v1421 = vpack.c.b16 %v851, %v845
  %v1422 = vpack.c.b16 %v852, %v846
  %v1423 = vpack.c.b16 %v859, %v853
  %v1424 = vpack.c.b16 %v860, %v854
  %v1425 = vpack.c.b16 %v861, %v855
  %v1426 = vpack.c.b16 %v862, %v856
  %v1427 = vpack.c.b16 %v863, %v857
  %v1428 = vpack.c.b16 %v864, %v858
  %v1429 = vpack.c.b16 %v871, %v865
  %v1430 = vpack.c.b16 %v872, %v866
  %v1431 = vpack.c.b16 %v873, %v867
  %v1432 = vpack.c.b16 %v874, %v868
  %v1433 = vpack.c.b16 %v875, %v869
  %v1434 = vpack.c.b16 %v876, %v870
  %v1435 = vpack.c.b16 %v883, %v877
  %v1436 = vpack.c.b16 %v884, %v878
  %v1437 = vpack.c.b16 %v885, %v879
  %v1438 = vpack.c.b16 %v886, %v880
  %v1439 = vpack.c.b16 %v887, %v881
  %v1440 = vpack.c.b16 %v888, %v882
  %v1441 = vpack.c.b16 %v895, %v889
  %v1442 = vpack.c.b16 %v896, %v890
  %v1443 = vpack.c.b16 %v897, %v891
  %v1444 = vpack.c.b16 %v898, %v892
  %v1445 = vpack.c.b16 %v899, %v893
  %v1446 = vpack.c.b16 %v900, %v894
  %v1447 = vpack.c.b16 %v907, %v901
  %v1448 = vpack.c.b16 %v908, %v902
  %v1449 = vpack.c.b16 %v909, %v903
  %v1450 = vpack.c.b16 %v910, %v904
  %v1451 = vpack.c.b16 %v911, %v905
  %v1452 = vpack.c.b16 %v912, %v906
  %v1453 = vpack.c.b16 %v919, %v913
  %v1454 = vpack.c.b16 %v920, %v914
  %v1455 = vpack.c.b16 %v921, %v915
  %v1456 = vpack.c.b16 %v922, %v916
  %v1457 = vpack.c.b16 %v923, %v917
  %v1458 = vpack.c.b16 %v924, %v918
  %v1459 = vpack.c.b16 %v931, %v925
  %v1460 = vpack.c.b16 %v932, %v926
  %v1461 = vpack.c.b16 %v933, %v927
  %v1462 = vpack.c.b16 %v934, %v928
  %v1463 = vpack.c.b16 %v935, %v929
  %v1464 = vpack.c.b16 %v936, %v930
  %v1465 = vpack.c.b16 %v943, %v937
  %v1466 = vpack.c.b16 %v944, %v938
  %v1467 = vpack.c.b16 %v945, %v939
  %v1468 = vpack.c.b16 %v946, %v940
  %v1469 = vpack.c.b16 %v947, %v941
  %v1470 = vpack.c.b16 %v948, %v942
  %v1471 = vpack.c.b16 %v955, %v949
  %v1472 = vpack.c.b16 %v956, %v950
  %v1473 = vpack.c.b16 %v957, %v951
  %v1474 = vpack.c.b16 %v958, %v952
  %v1475 = vpack.c.b16 %v959, %v953
  %v1476 = vpack.c.b16 %v960, %v954
  %v1477 = vpack.c.b16 %v967, %v961
  %v1478 = vpack.c.b16 %v968, %v962
  %v1479 = vpack.c.b16 %v969, %v963
  %v1480 = vpack.c.b16 %v970, %v964
  %v1481 = vpack.c.b16 %v971, %v965
  %v1482 = vpack.c.b16 %v972, %v966
  %v1483 = vpack.c.b16 %v979, %v973
  %v1484 = vpack.c.b16 %v980, %v974
  %v1485 = vpack.c.b16 %v981, %v975
  %v1486 = vpack.c.b16 %v982, %v976
  %v1487 = vpack.c.b16 %v983, %v977
  %v1488 = vpack.c.b16 %v984, %v978
  %v1489 = vpack.c.b16 %v991, %v985
  %v1490 = vpack.c.b16 %v992, %v986
  %v1491 = vpack.c.b16 %v993, %v987
  %v1492 = vpack.c.b16 %v994, %v988
  %v1493 = vpack.c.b16 %v995, %v989
  %v1494 = vpack.c.b16 %v996, %v990
  %v1495 = vpack.c.b16 %v1003, %v997
  %v1496 = vpack.c.b16 %v1004, %v998
  %v1497 = vpack.c.b16 %v1005, %v999
  %v1498 = vpack.c.b16 %v1006, %v1000
  %v1499 = vpack.c.b16 %v1007, %v1001
  %v1500 = vpack.c.b16 %v1008, %v1002
  %v1501 = vpack.c.b16 %v1015, %v1009
  %v1502 = vpack.c.b16 %v1016, %v1010
  %v1503 = vpack.c.b16 %v1017, %v1011
  %v1504 = vpack.c.b16 %v1018, %v1012
  %v1505 = vpack.c.b16 %v1019, %v1013
  %v1506 = vpack.c.b16 %v1020, %v1014
  %v1507 = vpack.c.b16 %v1027, %v1021
  %v1508 = vpack.c.b16 %v1028, %v1022
  %v1509 = vpack.c.b16 %v1029, %v1023
  %v1510 = vpack.c.b16 %v1030, %v1024
  %v1511 = vpack.c.b16 %v1031, %v1025
  %v1512 = vpack.c.b16 %v1032, %v1026
  %v1513 = vpack.c.b16 %v1039, %v1033
  %v1514 = vpack.c.b16 %v1040, %v1034
  %v1515 = vpack.c.b16 %v1041, %v1035
  %v1516 = vpack.c.b16 %v1042, %v1036
  %v1517 = vpack.c.b16 %v1043, %v1037
  %v1518 = vpack.c.b16 %v1044, %v1038
  %v1519 = vpack.c.b16 %v1051, %v1045
  %v1520 = vpack.c.b16 %v1052, %v1046
  %v1521 = vpack.c.b16 %v1053, %v1047
  %v1522 = vpack.c.b16 %v1054, %v1048
  %v1523 = vpack.c.b16 %v1055, %v1049
  %v1524 = vpack.c.b16 %v1056, %v1050
  %v1525 = vpack.c.b16 %v1063, %v1057
  %v1526 = vpack.c.b16 %v1064, %v1058
  %v1527 = vpack.c.b16 %v1065, %v1059
  %v1528 = vpack.c.b16 %v1066, %v1060
  %v1529 = vpack.c.b16 %v1067, %v1061
  %v1530 = vpack.c.b16 %v1068, %v1062
  %v1531 = vpack.c.b16 %v1075, %v1069
  %v1532 = vpack.c.b16 %v1076, %v1070
  %v1533 = vpack.c.b16 %v1077, %v1071
  %v1534 = vpack.c.b16 %v1078, %v1072
  %v1535 = vpack.c.b16 %v1079, %v1073
  %v1536 = vpack.c.b16 %v1080, %v1074
  %v1537 = vpack.c.b16 %v1087, %v1081
  %v1538 = vpack.c.b16 %v1088, %v1082
  %v1539 = vpack.c.b16 %v1089, %v1083
  %v1540 = vpack.c.b16 %v1090, %v1084
  %v1541 = vpack.c.b16 %v1091, %v1085
  %v1542 = vpack.c.b16 %v1092, %v1086
  %v1543 = vpack.c.b16 %v1099, %v1093
  %v1544 = vpack.c.b16 %v1100, %v1094
  %v1545 = vpack.c.b16 %v1101, %v1095
  %v1546 = vpack.c.b16 %v1102, %v1096
  %v1547 = vpack.c.b16 %v1103, %v1097
  %v1548 = vpack.c.b16 %v1104, %v1098
  %v1549 = vpack.c.b16 %v1111, %v1105
  %v1550 = vpack.c.b16 %v1112, %v1106
  %v1551 = vpack.c.b16 %v1113, %v1107
  %v1552 = vpack.c.b16 %v1114, %v1108
  %v1553 = vpack.c.b16 %v1115, %v1109
  %v1554 = vpack.c.b16 %v1116, %v1110
  %v1555 = vpack.c.b16 %v1123, %v1117
  %v1556 = vpack.c.b16 %v1124, %v1118
  %v1557 = vpack.c.b16 %v1125, %v1119
  %v1558 = vpack.c.b16 %v1126, %v1120
  %v1559 = vpack.c.b16 %v1127, %v1121
  %v1560 = vpack.c.b16 %v1128, %v1122
  %v1561 = vpack.c.b16 %v1135, %v1129
  %v1562 = vpack.c.b16 %v1136, %v1130
  %v1563 = vpack.c.b16 %v1137, %v1131
  %v1564 = vpack.c.b16 %v1138, %v1132
  %v1565 = vpack.c.b16 %v1139, %v1133
  %v1566 = vpack.c.b16 %v1140, %v1134
  %v1567 = vpack.c.b16 %v1147, %v1141
  %v1568 = vpack.c.b16 %v1148, %v1142
  %v1569 = vpack.c.b16 %v1149, %v1143
  %v1570 = vpack.c.b16 %v1150, %v1144
  %v1571 = vpack.c.b16 %v1151, %v1145
  %v1572 = vpack.c.b16 %v1152, %v1146
  %v1573 = vpack.c.b16 %v1159, %v1153
  %v1574 = vpack.c.b16 %v1160, %v1154
  %v1575 = vpack.c.b16 %v1161, %v1155
  %v1576 = vpack.c.b16 %v1162, %v1156
  %v1577 = vpack.c.b16 %v1163, %v1157
  %v1578 = vpack.c.b16 %v1164, %v1158
  %v1579 = vpack.c.b16 %v1171, %v1165
  %v1580 = vpack.c.b16 %v1172, %v1166
  %v1581 = vpack.c.b16 %v1173, %v1167
  %v1582 = vpack.c.b16 %v1174, %v1168
  %v1583 = vpack.c.b16 %v1175, %v1169
  %v1584 = vpack.c.b16 %v1176, %v1170
  %v1585 = vpack.c.b16 %v1183, %v1177
  %v1586 = vpack.c.b16 %v1184, %v1178
  %v1587 = vpack.c.b16 %v1185, %v1179
  %v1588 = vpack.c.b16 %v1186, %v1180
  %v1589 = vpack.c.b16 %v1187, %v1181
  %v1590 = vpack.c.b16 %v1188, %v1182
  %v1591 = vpack.c.b16 %v1195, %v1189
  %v1592 = vpack.c.b16 %v1196, %v1190
  %v1593 = vpack.c.b16 %v1197, %v1191
  %v1594 = vpack.c.b16 %v1198, %v1192
  %v1595 = vpack.c.b16 %v1199, %v1193
  %v1596 = vpack.c.b16 %v1200, %v1194
  %v1597 = vpack.c.b16 %v1207, %v1201
  %v1598 = vpack.c.b16 %v1208, %v1202
  %v1599 = vpack.c.b16 %v1209, %v1203
  %v1600 = vpack.c.b16 %v1210, %v1204
  %v1601 = vpack.c.b16 %v1211, %v1205
  %v1602 = vpack.c.b16 %v1212, %v1206
  %v1603 = vpack.c.b16 %v1219, %v1213
  %v1604 = vpack.c.b16 %v1220, %v1214
  %v1605 = vpack.c.b16 %v1221, %v1215
  %v1606 = vpack.c.b16 %v1222, %v1216
  %v1607 = vpack.c.b16 %v1223, %v1217
  %v1608 = vpack.c.b16 %v1224, %v1218
  %v1609 = vpack.c.b16 %v1231, %v1225
  %v1610 = vpack.c.b16 %v1232, %v1226
  %v1611 = vpack.c.b16 %v1233, %v1227
  %v1612 = vpack.c.b16 %v1234, %v1228
  %v1613 = vpack.c.b16 %v1235, %v1229
  %v1614 = vpack.c.b16 %v1236, %v1230
  %v1615 = vpack.c.b16 %v1243, %v1237
  %v1616 = vpack.c.b16 %v1244, %v1238
  %v1617 = vpack.c.b16 %v1245, %v1239
  %v1618 = vpack.c.b16 %v1246, %v1240
  %v1619 = vpack.c.b16 %v1247, %v1241
  %v1620 = vpack.c.b16 %v1248, %v1242
  %v1621 = vpack.c.b16 %v1255, %v1249
  %v1622 = vpack.c.b16 %v1256, %v1250
  %v1623 = vpack.c.b16 %v1257, %v1251
  %v1624 = vpack.c.b16 %v1258, %v1252
  %v1625 = vpack.c.b16 %v1259, %v1253
  %v1626 = vpack.c.b16 %v1260, %v1254
  %v1627 = vpack.c.b16 %v1267, %v1261
  %v1628 = vpack.c.b16 %v1268, %v1262
  %v1629 = vpack.c.b16 %v1269, %v1263
  %v1630 = vpack.c.b16 %v1270, %v1264
  %v1631 = vpack.c.b16 %v1271, %v1265
  %v1632 = vpack.c.b16 %v1272, %v1266
  %v1633 = vpack.c.b16 %v1279, %v1273
  %v1634 = vpack.c.b16 %v1280, %v1274
  %v1635 = vpack.c.b16 %v1281, %v1275
  %v1636 = vpack.c.b16 %v1282, %v1276
  %v1637 = vpack.c.b16 %v1283, %v1277
  %v1638 = vpack.c.b16 %v1284, %v1278
  %v1639 = vpack.c.b16 %v1291, %v1285
  %v1640 = vpack.c.b16 %v1292, %v1286
  %v1641 = vpack.c.b16 %v1293, %v1287
  %v1642 = vpack.c.b16 %v1294, %v1288
  %v1643 = vpack.c.b16 %v1295, %v1289
  %v1644 = vpack.c.b16 %v1296, %v1290
  %v1645 = vpack.c.b16 %v1303, %v1297
  %v1646 = vpack.c.b16 %v1304, %v1298
  %v1647 = vpack.c.b16 %v1305, %v1299
  %v1648 = vpack.c.b16 %v1306, %v1300
  %v1649 = vpack.c.b16 %v1307, %v1301
  %v1650 = vpack.c.b16 %v1308, %v1302
  %v1651 = vpack.c.b16 %v1315, %v1309
  %v1652 = vpack.c.b16 %v1316, %v1310
  %v1653 = vpack.c.b16 %v1317, %v1311
  %v1654 = vpack.c.b16 %v1318, %v1312
  %v1655 = vpack.c.b16 %v1319, %v1313
  %v1656 = vpack.c.b16 %v1320, %v1314
  %v1657 = vpack.c.b16 %v1327, %v1321
  %v1658 = vpack.c.b16 %v1328, %v1322
  %v1659 = vpack.c.b16 %v1329, %v1323
  %v1660 = vpack.c.b16 %v1330, %v1324
  %v1661 = vpack.c.b16 %v1331, %v1325
  %v1662 = vpack.c.b16 %v1332, %v1326
  %v1663 = vpack.c.b16 %v1339, %v1333
  %v1664 = vpack.c.b16 %v1340, %v1334
  %v1665 = vpack.c.b16 %v1341, %v1335
  %v1666 = vpack.c.b16 %v1342, %v1336
  %v1667 = vpack.c.b16 %v1343, %v1337
  %v1668 = vpack.c.b16 %v1344, %v1338
  %v1669 = vpack.c.b16 %v1351, %v1345
  %v1670 = vpack.c.b16 %v1352, %v1346
  %v1671 = vpack.c.b16 %v1353, %v1347
  %v1672 = vpack.c.b16 %v1354, %v1348
  %v1673 = vpack.c.b16 %v1355, %v1349
  %v1674 = vpack.c.b16 %v1356, %v1350
  %v1675 = vpack.c.b16 %v1363, %v1357
  %v1676 = vpack.c.b16 %v1364, %v1358
  %v1677 = vpack.c.b16 %v1365, %v1359
  %v1678 = vpack.c.b16 %v1366, %v1360
  %v1679 = vpack.c.b16 %v1367, %v1361
  %v1680 = vpack.c.b16 %v1368, %v1362
  %v1681 = vpack.c.b16 %v1375, %v1369
  %v1682 = vpack.c.b16 %v1376, %v1370
  %v1683 = vpack.c.b16 %v1377, %v1371
  %v1684 = vpack.c.b16 %v1378, %v1372
  %v1685 = vpack.c.b16 %v1379, %v1373
  %v1686 = vpack.c.b16 %v1380, %v1374
  %v1687 = vpack.c.b16 %v1387, %v1381
  %v1688 = vpack.c.b16 %v1388, %v1382
  %v1689 = vpack.c.b16 %v1389, %v1383
  %v1690 = vpack.c.b16 %v1390, %v1384
  %v1691 = vpack.c.b16 %v1391, %v1385
  %v1692 = vpack.c.b16 %v1392, %v1386
  %v1693 = vpack.c.b16 %v1399, %v1393
  %v1694 = vpack.c.b16 %v1400, %v1394
  %v1695 = vpack.c.b16 %v1401, %v1395
  %v1696 = vpack.c.b16 %v1402, %v1396
  %v1697 = vpack.c.b16 %v1403, %v1397
  %v1698 = vpack.c.b16 %v1404, %v1398
  %v1699 = vpack.c.b16 %v1411, %v1405
  %v1700 = vpack.c.b16 %v1412, %v1406
  %v1701 = vpack.c.b16 %v1413, %v1407
  %v1702 = vpack.c.b16 %v1414, %v1408
  %v1703 = vpack.c.b16 %v1415, %v1409
  %v1704 = vpack.c.b16 %v1416, %v1410
  %1993 = vmatprep.subr.bf16.mxu0 %v1418
  %1994 = vmatpush1.bf16.msra.mxu0 %v1417
  %1995 = vmatprep.subr.bf16.mxu0 %v1424
  %1996 = vmatpush1.bf16.msra.mxu0 %v1423
  %1997 = vmatprep.subr.bf16.mxu0 %v1430
  %1998 = vmatpush1.bf16.msra.mxu0 %v1429
  %1999 = vmatprep.subr.bf16.mxu0 %v1436
  %2000 = vmatpush1.bf16.msra.mxu0 %v1435
  %2001 = vmatprep.subr.bf16.mxu0 %v1442
  %2002 = vmatpush1.bf16.msra.mxu0 %v1441
  %2003 = vmatprep.subr.bf16.mxu0 %v1448
  %2004 = vmatpush1.bf16.msra.mxu0 %v1447
  %2005 = vmatprep.subr.bf16.mxu0 %v1454
  %2006 = vmatpush1.bf16.msra.mxu0 %v1453
  %2007 = vmatprep.subr.bf16.mxu0 %v1460
  %2008 = vmatpush1.bf16.msra.mxu0 %v1459
  %2009 = vmatprep.subr.bf16.mxu0 %v1466
  %2010 = vmatpush1.bf16.msra.mxu0 %v1465
  %2011 = vmatprep.subr.bf16.mxu0 %v1472
  %2012 = vmatpush1.bf16.msra.mxu0 %v1471
  %2013 = vmatprep.subr.bf16.mxu0 %v1478
  %2014 = vmatpush1.bf16.msra.mxu0 %v1477
  %2015 = vmatprep.subr.bf16.mxu0 %v1484
  %2016 = vmatpush1.bf16.msra.mxu0 %v1483
  %2017 = vmatprep.subr.bf16.mxu0 %v1490
  %2018 = vmatpush1.bf16.msra.mxu0 %v1489
  %2019 = vmatprep.subr.bf16.mxu0 %v1496
  %2020 = vmatpush1.bf16.msra.mxu0 %v1495
  %2021 = vmatprep.subr.bf16.mxu0 %v1502
  %2022 = vmatpush1.bf16.msra.mxu0 %v1501
  %2023 = vmatprep.subr.bf16.mxu0 %v1508
  %2024 = vmatpush1.bf16.msra.mxu0 %v1507
  %2025 = vmatprep.mubr.bf16.mxu0 %v530
  %2026 = vmatmul.mubr.bf16.gmra.mrb[0].mxu0 %v529
  %v2027 = vpop.f32.mrb[0].mxu0
  %v2028 = vadd.f32 %v466, %v2027
  %v2029 = vpop.f32.mrb[0].mxu0
  %v2030 = vadd.f32 %v470, %v2029
  %v2031 = vpop.f32.mrb[0].mxu0
  %v2032 = vadd.f32 %v466, %v2031
  %v2033 = vpop.f32.mrb[0].mxu0
  %v2034 = vadd.f32 %v470, %v2033
  %2035 = vmatprep.mubr.bf16.mxu0 %v536
  %2036 = vmatmul.mubr.bf16.gmra.mrb[0].mxu0 %v535
  %v2037 = vpop.f32.mrb[0].mxu0
  %v2038 = vadd.f32 %v466, %v2037
  %v2039 = vpop.f32.mrb[0].mxu0
  %v2040 = vadd.f32 %v470, %v2039
  %v2041 = vpop.f32.mrb[0].mxu0
  %v2042 = vadd.f32 %v466, %v2041
  %v2043 = vpop.f32.mrb[0].mxu0
  %v2044 = vadd.f32 %v470, %v2043
  %2045 = vdwg.mxu0
  %2046 = vmatprep.subr.bf16.mxu0 %v1514
  %2047 = vmatpush1.bf16.msra.mxu0 %v1513
  %2048 = vmatprep.subr.bf16.mxu0 %v1520
  %2049 = vmatpush1.bf16.msra.mxu0 %v1519
  %2050 = vmatprep.subr.bf16.mxu0 %v1526
  %2051 = vmatpush1.bf16.msra.mxu0 %v1525
  %2052 = vmatprep.subr.bf16.mxu0 %v1532
  %2053 = vmatpush1.bf16.msra.mxu0 %v1531
  %2054 = vmatprep.subr.bf16.mxu0 %v1538
  %2055 = vmatpush1.bf16.msra.mxu0 %v1537
  %2056 = vmatprep.subr.bf16.mxu0 %v1544
  %2057 = vmatpush1.bf16.msra.mxu0 %v1543
  %2058 = vmatprep.subr.bf16.mxu0 %v1550
  %2059 = vmatpush1.bf16.msra.mxu0 %v1549
  %2060 = vmatprep.subr.bf16.mxu0 %v1556
  %2061 = vmatpush1.bf16.msra.mxu0 %v1555
  %2062 = vmatprep.subr.bf16.mxu0 %v1562
  %2063 = vmatpush1.bf16.msra.mxu0 %v1561
  %2064 = vmatprep.subr.bf16.mxu0 %v1568
  %2065 = vmatpush1.bf16.msra.mxu0 %v1567
  %2066 = vmatprep.subr.bf16.mxu0 %v1574
  %2067 = vmatpush1.bf16.msra.mxu0 %v1573
  %2068 = vmatprep.subr.bf16.mxu0 %v1580
  %2069 = vmatpush1.bf16.msra.mxu0 %v1579
  %2070 = vmatprep.subr.bf16.mxu0 %v1586
  %2071 = vmatpush1.bf16.msra.mxu0 %v1585
  %2072 = vmatprep.subr.bf16.mxu0 %v1592
  %2073 = vmatpush1.bf16.msra.mxu0 %v1591
  %2074 = vmatprep.subr.bf16.mxu0 %v1598
  %2075 = vmatpush1.bf16.msra.mxu0 %v1597
  %2076 = vmatprep.subr.bf16.mxu0 %v1604
  %2077 = vmatpush1.bf16.msra.mxu0 %v1603
  %2078 = vmatprep.mubr.bf16.mxu0 %v532
  %2079 = vmatmul.mubr.bf16.gmra.mrb[0].mxu0 %v531
  %v2080 = vpop.f32.mrb[0].mxu0
  %v2081 = vadd.f32 %v2028, %v2080
  %v2082 = vpop.f32.mrb[0].mxu0
  %v2083 = vadd.f32 %v2030, %v2082
  %v2084 = vpop.f32.mrb[0].mxu0
  %v2085 = vadd.f32 %v2032, %v2084
  %v2086 = vpop.f32.mrb[0].mxu0
  %v2087 = vadd.f32 %v2034, %v2086
  %2088 = vmatprep.mubr.bf16.mxu0 %v538
  %2089 = vmatmul.mubr.bf16.gmra.mrb[0].mxu0 %v537
  %v2090 = vpop.f32.mrb[0].mxu0
  %v2091 = vadd.f32 %v2038, %v2090
  %v2092 = vpop.f32.mrb[0].mxu0
  %v2093 = vadd.f32 %v2040, %v2092
  %v2094 = vpop.f32.mrb[0].mxu0
  %v2095 = vadd.f32 %v2042, %v2094
  %v2096 = vpop.f32.mrb[0].mxu0
  %v2097 = vadd.f32 %v2044, %v2096
  %2098 = vdwg.mxu0
  %2099 = vmatprep.subr.bf16.mxu0 %v1610
  %2100 = vmatpush1.bf16.msra.mxu0 %v1609
  %2101 = vmatprep.subr.bf16.mxu0 %v1616
  %2102 = vmatpush1.bf16.msra.mxu0 %v1615
  %2103 = vmatprep.subr.bf16.mxu0 %v1622
  %2104 = vmatpush1.bf16.msra.mxu0 %v1621
  %2105 = vmatprep.subr.bf16.mxu0 %v1628
  %2106 = vmatpush1.bf16.msra.mxu0 %v1627
  %2107 = vmatprep.subr.bf16.mxu0 %v1634
  %2108 = vmatpush1.bf16.msra.mxu0 %v1633
  %2109 = vmatprep.subr.bf16.mxu0 %v1640
  %2110 = vmatpush1.bf16.msra.mxu0 %v1639
  %2111 = vmatprep.subr.bf16.mxu0 %v1646
  %2112 = vmatpush1.bf16.msra.mxu0 %v1645
  %2113 = vmatprep.subr.bf16.mxu0 %v1652
  %2114 = vmatpush1.bf16.msra.mxu0 %v1651
  %2115 = vmatprep.subr.bf16.mxu0 %v1658
  %2116 = vmatpush1.bf16.msra.mxu0 %v1657
  %2117 = vmatprep.subr.bf16.mxu0 %v1664
  %2118 = vmatpush1.bf16.msra.mxu0 %v1663
  %2119 = vmatprep.subr.bf16.mxu0 %v1670
  %2120 = vmatpush1.bf16.msra.mxu0 %v1669
  %2121 = vmatprep.subr.bf16.mxu0 %v1676
  %2122 = vmatpush1.bf16.msra.mxu0 %v1675
  %2123 = vmatprep.subr.bf16.mxu0 %v1682
  %2124 = vmatpush1.bf16.msra.mxu0 %v1681
  %2125 = vmatprep.subr.bf16.mxu0 %v1688
  %2126 = vmatpush1.bf16.msra.mxu0 %v1687
  %2127 = vmatprep.subr.bf16.mxu0 %v1694
  %2128 = vmatpush1.bf16.msra.mxu0 %v1693
  %2129 = vmatprep.subr.bf16.mxu0 %v1700
  %2130 = vmatpush1.bf16.msra.mxu0 %v1699
  %2131 = vmatprep.mubr.bf16.mxu0 %v534
  %2132 = vmatmul.mubr.bf16.gmra.mrb[0].mxu0 %v533
  %v2133 = vpop.f32.mrb[0].mxu0
  %v2134 = vadd.f32 %v2081, %v2133
  %v2135 = vpop.f32.mrb[0].mxu0
  %v2136 = vadd.f32 %v2083, %v2135
  %v2137 = vpop.f32.mrb[0].mxu0
  %v2138 = vadd.f32 %v2085, %v2137
  %v2139 = vpop.f32.mrb[0].mxu0
  %v2140 = vadd.f32 %v2087, %v2139
  %2141 = vmatprep.mubr.bf16.mxu0 %v540
  %2142 = vmatmul.mubr.bf16.gmra.mrb[0].mxu0 %v539
  %v2143 = vpop.f32.mrb[0].mxu0
  %v2144 = vadd.f32 %v2091, %v2143
  %v2145 = vpop.f32.mrb[0].mxu0
  %v2146 = vadd.f32 %v2093, %v2145
  %v2147 = vpop.f32.mrb[0].mxu0
  %v2148 = vadd.f32 %v2095, %v2147
  %v2149 = vpop.f32.mrb[0].mxu0
  %v2150 = vadd.f32 %v2097, %v2149
  %2151 = vdwg.mxu0
  %2152 = vmatprep.subr.bf16.mxu0 %v1420
  %2153 = vmatpush1.bf16.msra.mxu0 %v1419
  %2154 = vmatprep.subr.bf16.mxu0 %v1426
  %2155 = vmatpush1.bf16.msra.mxu0 %v1425
  %2156 = vmatprep.subr.bf16.mxu0 %v1432
  %2157 = vmatpush1.bf16.msra.mxu0 %v1431
  %2158 = vmatprep.subr.bf16.mxu0 %v1438
  %2159 = vmatpush1.bf16.msra.mxu0 %v1437
  %2160 = vmatprep.subr.bf16.mxu0 %v1444
  %2161 = vmatpush1.bf16.msra.mxu0 %v1443
  %2162 = vmatprep.subr.bf16.mxu0 %v1450
  %2163 = vmatpush1.bf16.msra.mxu0 %v1449
  %2164 = vmatprep.subr.bf16.mxu0 %v1456
  %2165 = vmatpush1.bf16.msra.mxu0 %v1455
  %2166 = vmatprep.subr.bf16.mxu0 %v1462
  %2167 = vmatpush1.bf16.msra.mxu0 %v1461
  %2168 = vmatprep.subr.bf16.mxu0 %v1468
  %2169 = vmatpush1.bf16.msra.mxu0 %v1467
  %2170 = vmatprep.subr.bf16.mxu0 %v1474
  %2171 = vmatpush1.bf16.msra.mxu0 %v1473
  %2172 = vmatprep.subr.bf16.mxu0 %v1480
  %2173 = vmatpush1.bf16.msra.mxu0 %v1479
  %2174 = vmatprep.subr.bf16.mxu0 %v1486
  %2175 = vmatpush1.bf16.msra.mxu0 %v1485
  %2176 = vmatprep.subr.bf16.mxu0 %v1492
  %2177 = vmatpush1.bf16.msra.mxu0 %v1491
  %2178 = vmatprep.subr.bf16.mxu0 %v1498
  %2179 = vmatpush1.bf16.msra.mxu0 %v1497
  %2180 = vmatprep.subr.bf16.mxu0 %v1504
  %2181 = vmatpush1.bf16.msra.mxu0 %v1503
  %2182 = vmatprep.subr.bf16.mxu0 %v1510
  %2183 = vmatpush1.bf16.msra.mxu0 %v1509
  %2184 = vmatprep.mubr.bf16.mxu0 %v530
  %2185 = vmatmul.mubr.bf16.gmra.mrb[0].mxu0 %v529
  %v2186 = vpop.f32.mrb[0].mxu0
  %v2187 = vadd.f32 %v474, %v2186
  %v2188 = vpop.f32.mrb[0].mxu0
  %v2189 = vadd.f32 %v478, %v2188
  %v2190 = vpop.f32.mrb[0].mxu0
  %v2191 = vadd.f32 %v474, %v2190
  %v2192 = vpop.f32.mrb[0].mxu0
  %v2193 = vadd.f32 %v478, %v2192
  %2194 = vmatprep.mubr.bf16.mxu0 %v536
  %2195 = vmatmul.mubr.bf16.gmra.mrb[0].mxu0 %v535
  %v2196 = vpop.f32.mrb[0].mxu0
  %v2197 = vadd.f32 %v474, %v2196
  %v2198 = vpop.f32.mrb[0].mxu0
  %v2199 = vadd.f32 %v478, %v2198
  %v2200 = vpop.f32.mrb[0].mxu0
  %v2201 = vadd.f32 %v474, %v2200
  %v2202 = vpop.f32.mrb[0].mxu0
  %v2203 = vadd.f32 %v478, %v2202
  %2204 = vdwg.mxu0
  %2205 = vmatprep.subr.bf16.mxu0 %v1516
  %2206 = vmatpush1.bf16.msra.mxu0 %v1515
  %2207 = vmatprep.subr.bf16.mxu0 %v1522
  %2208 = vmatpush1.bf16.msra.mxu0 %v1521
  %2209 = vmatprep.subr.bf16.mxu0 %v1528
  %2210 = vmatpush1.bf16.msra.mxu0 %v1527
  %2211 = vmatprep.subr.bf16.mxu0 %v1534
  %2212 = vmatpush1.bf16.msra.mxu0 %v1533
  %2213 = vmatprep.subr.bf16.mxu0 %v1540
  %2214 = vmatpush1.bf16.msra.mxu0 %v1539
  %2215 = vmatprep.subr.bf16.mxu0 %v1546
  %2216 = vmatpush1.bf16.msra.mxu0 %v1545
  %2217 = vmatprep.subr.bf16.mxu0 %v1552
  %2218 = vmatpush1.bf16.msra.mxu0 %v1551
  %2219 = vmatprep.subr.bf16.mxu0 %v1558
  %2220 = vmatpush1.bf16.msra.mxu0 %v1557
  %2221 = vmatprep.subr.bf16.mxu0 %v1564
  %2222 = vmatpush1.bf16.msra.mxu0 %v1563
  %2223 = vmatprep.subr.bf16.mxu0 %v1570
  %2224 = vmatpush1.bf16.msra.mxu0 %v1569
  %2225 = vmatprep.subr.bf16.mxu0 %v1576
  %2226 = vmatpush1.bf16.msra.mxu0 %v1575
  %2227 = vmatprep.subr.bf16.mxu0 %v1582
  %2228 = vmatpush1.bf16.msra.mxu0 %v1581
  %2229 = vmatprep.subr.bf16.mxu0 %v1588
  %2230 = vmatpush1.bf16.msra.mxu0 %v1587
  %2231 = vmatprep.subr.bf16.mxu0 %v1594
  %2232 = vmatpush1.bf16.msra.mxu0 %v1593
  %2233 = vmatprep.subr.bf16.mxu0 %v1600
  %2234 = vmatpush1.bf16.msra.mxu0 %v1599
  %2235 = vmatprep.subr.bf16.mxu0 %v1606
  %2236 = vmatpush1.bf16.msra.mxu0 %v1605
  %2237 = vmatprep.mubr.bf16.mxu0 %v532
  %2238 = vmatmul.mubr.bf16.gmra.mrb[0].mxu0 %v531
  %v2239 = vpop.f32.mrb[0].mxu0
  %v2240 = vadd.f32 %v2187, %v2239
  %v2241 = vpop.f32.mrb[0].mxu0
  %v2242 = vadd.f32 %v2189, %v2241
  %v2243 = vpop.f32.mrb[0].mxu0
  %v2244 = vadd.f32 %v2191, %v2243
  %v2245 = vpop.f32.mrb[0].mxu0
  %v2246 = vadd.f32 %v2193, %v2245
  %2247 = vmatprep.mubr.bf16.mxu0 %v538
  %2248 = vmatmul.mubr.bf16.gmra.mrb[0].mxu0 %v537
  %v2249 = vpop.f32.mrb[0].mxu0
  %v2250 = vadd.f32 %v2197, %v2249
  %v2251 = vpop.f32.mrb[0].mxu0
  %v2252 = vadd.f32 %v2199, %v2251
  %v2253 = vpop.f32.mrb[0].mxu0
  %v2254 = vadd.f32 %v2201, %v2253
  %v2255 = vpop.f32.mrb[0].mxu0
  %v2256 = vadd.f32 %v2203, %v2255
  %2257 = vdwg.mxu0
  %2258 = vmatprep.subr.bf16.mxu0 %v1612
  %2259 = vmatpush1.bf16.msra.mxu0 %v1611
  %2260 = vmatprep.subr.bf16.mxu0 %v1618
  %2261 = vmatpush1.bf16.msra.mxu0 %v1617
  %2262 = vmatprep.subr.bf16.mxu0 %v1624
  %2263 = vmatpush1.bf16.msra.mxu0 %v1623
  %2264 = vmatprep.subr.bf16.mxu0 %v1630
  %2265 = vmatpush1.bf16.msra.mxu0 %v1629
  %2266 = vmatprep.subr.bf16.mxu0 %v1636
  %2267 = vmatpush1.bf16.msra.mxu0 %v1635
  %2268 = vmatprep.subr.bf16.mxu0 %v1642
  %2269 = vmatpush1.bf16.msra.mxu0 %v1641
  %2270 = vmatprep.subr.bf16.mxu0 %v1648
  %2271 = vmatpush1.bf16.msra.mxu0 %v1647
  %2272 = vmatprep.subr.bf16.mxu0 %v1654
  %2273 = vmatpush1.bf16.msra.mxu0 %v1653
  %2274 = vmatprep.subr.bf16.mxu0 %v1660
  %2275 = vmatpush1.bf16.msra.mxu0 %v1659
  %2276 = vmatprep.subr.bf16.mxu0 %v1666
  %2277 = vmatpush1.bf16.msra.mxu0 %v1665
  %2278 = vmatprep.subr.bf16.mxu0 %v1672
  %2279 = vmatpush1.bf16.msra.mxu0 %v1671
  %2280 = vmatprep.subr.bf16.mxu0 %v1678
  %2281 = vmatpush1.bf16.msra.mxu0 %v1677
  %2282 = vmatprep.subr.bf16.mxu0 %v1684
  %2283 = vmatpush1.bf16.msra.mxu0 %v1683
  %2284 = vmatprep.subr.bf16.mxu0 %v1690
  %2285 = vmatpush1.bf16.msra.mxu0 %v1689
  %2286 = vmatprep.subr.bf16.mxu0 %v1696
  %2287 = vmatpush1.bf16.msra.mxu0 %v1695
  %2288 = vmatprep.subr.bf16.mxu0 %v1702
  %2289 = vmatpush1.bf16.msra.mxu0 %v1701
  %2290 = vmatprep.mubr.bf16.mxu0 %v534
  %2291 = vmatmul.mubr.bf16.gmra.mrb[0].mxu0 %v533
  %v2292 = vpop.f32.mrb[0].mxu0
  %v2293 = vadd.f32 %v2240, %v2292
  %v2294 = vpop.f32.mrb[0].mxu0
  %v2295 = vadd.f32 %v2242, %v2294
  %v2296 = vpop.f32.mrb[0].mxu0
  %v2297 = vadd.f32 %v2244, %v2296
  %v2298 = vpop.f32.mrb[0].mxu0
  %v2299 = vadd.f32 %v2246, %v2298
  %2300 = vmatprep.mubr.bf16.mxu0 %v540
  %2301 = vmatmul.mubr.bf16.gmra.mrb[0].mxu0 %v539
  %v2302 = vpop.f32.mrb[0].mxu0
  %v2303 = vadd.f32 %v2250, %v2302
  %v2304 = vpop.f32.mrb[0].mxu0
  %v2305 = vadd.f32 %v2252, %v2304
  %v2306 = vpop.f32.mrb[0].mxu0
  %v2307 = vadd.f32 %v2254, %v2306
  %v2308 = vpop.f32.mrb[0].mxu0
  %v2309 = vadd.f32 %v2256, %v2308
  %2310 = vdwg.mxu0
  %2311 = vmatprep.subr.bf16.mxu0 %v1422
  %2312 = vmatpush1.bf16.msra.mxu0 %v1421
  %2313 = vmatprep.subr.bf16.mxu0 %v1428
  %2314 = vmatpush1.bf16.msra.mxu0 %v1427
  %2315 = vmatprep.subr.bf16.mxu0 %v1434
  %2316 = vmatpush1.bf16.msra.mxu0 %v1433
  %2317 = vmatprep.subr.bf16.mxu0 %v1440
  %2318 = vmatpush1.bf16.msra.mxu0 %v1439
  %2319 = vmatprep.subr.bf16.mxu0 %v1446
  %2320 = vmatpush1.bf16.msra.mxu0 %v1445
  %2321 = vmatprep.subr.bf16.mxu0 %v1452
  %2322 = vmatpush1.bf16.msra.mxu0 %v1451
  %2323 = vmatprep.subr.bf16.mxu0 %v1458
  %2324 = vmatpush1.bf16.msra.mxu0 %v1457
  %2325 = vmatprep.subr.bf16.mxu0 %v1464
  %2326 = vmatpush1.bf16.msra.mxu0 %v1463
  %2327 = vmatprep.subr.bf16.mxu0 %v1470
  %2328 = vmatpush1.bf16.msra.mxu0 %v1469
  %2329 = vmatprep.subr.bf16.mxu0 %v1476
  %2330 = vmatpush1.bf16.msra.mxu0 %v1475
  %2331 = vmatprep.subr.bf16.mxu0 %v1482
  %2332 = vmatpush1.bf16.msra.mxu0 %v1481
  %2333 = vmatprep.subr.bf16.mxu0 %v1488
  %2334 = vmatpush1.bf16.msra.mxu0 %v1487
  %2335 = vmatprep.subr.bf16.mxu0 %v1494
  %2336 = vmatpush1.bf16.msra.mxu0 %v1493
  %2337 = vmatprep.subr.bf16.mxu0 %v1500
  %2338 = vmatpush1.bf16.msra.mxu0 %v1499
  %2339 = vmatprep.subr.bf16.mxu0 %v1506
  %2340 = vmatpush1.bf16.msra.mxu0 %v1505
  %2341 = vmatprep.subr.bf16.mxu0 %v1512
  %2342 = vmatpush1.bf16.msra.mxu0 %v1511
  %2343 = vmatprep.mubr.bf16.mxu0 %v530
  %2344 = vmatmul.mubr.bf16.gmra.mrb[0].mxu0 %v529
  %v2345 = vpop.f32.mrb[0].mxu0
  %v2346 = vadd.f32 %v482, %v2345
  %v2347 = vpop.f32.mrb[0].mxu0
  %v2348 = vadd.f32 %v486, %v2347
  %v2349 = vpop.f32.mrb[0].mxu0
  %v2350 = vadd.f32 %v482, %v2349
  %v2351 = vpop.f32.mrb[0].mxu0
  %v2352 = vadd.f32 %v486, %v2351
  %2353 = vmatprep.mubr.bf16.mxu0 %v536
  %2354 = vmatmul.mubr.bf16.gmra.mrb[0].mxu0 %v535
  %v2355 = vpop.f32.mrb[0].mxu0
  %v2356 = vadd.f32 %v482, %v2355
  %v2357 = vpop.f32.mrb[0].mxu0
  %v2358 = vadd.f32 %v486, %v2357
  %v2359 = vpop.f32.mrb[0].mxu0
  %v2360 = vadd.f32 %v482, %v2359
  %v2361 = vpop.f32.mrb[0].mxu0
  %v2362 = vadd.f32 %v486, %v2361
  %2363 = vdwg.mxu0
  %2364 = vmatprep.subr.bf16.mxu0 %v1518
  %2365 = vmatpush1.bf16.msra.mxu0 %v1517
  %2366 = vmatprep.subr.bf16.mxu0 %v1524
  %2367 = vmatpush1.bf16.msra.mxu0 %v1523
  %2368 = vmatprep.subr.bf16.mxu0 %v1530
  %2369 = vmatpush1.bf16.msra.mxu0 %v1529
  %2370 = vmatprep.subr.bf16.mxu0 %v1536
  %2371 = vmatpush1.bf16.msra.mxu0 %v1535
  %2372 = vmatprep.subr.bf16.mxu0 %v1542
  %2373 = vmatpush1.bf16.msra.mxu0 %v1541
  %2374 = vmatprep.subr.bf16.mxu0 %v1548
  %2375 = vmatpush1.bf16.msra.mxu0 %v1547
  %2376 = vmatprep.subr.bf16.mxu0 %v1554
  %2377 = vmatpush1.bf16.msra.mxu0 %v1553
  %2378 = vmatprep.subr.bf16.mxu0 %v1560
  %2379 = vmatpush1.bf16.msra.mxu0 %v1559
  %2380 = vmatprep.subr.bf16.mxu0 %v1566
  %2381 = vmatpush1.bf16.msra.mxu0 %v1565
  %2382 = vmatprep.subr.bf16.mxu0 %v1572
  %2383 = vmatpush1.bf16.msra.mxu0 %v1571
  %2384 = vmatprep.subr.bf16.mxu0 %v1578
  %2385 = vmatpush1.bf16.msra.mxu0 %v1577
  %2386 = vmatprep.subr.bf16.mxu0 %v1584
  %2387 = vmatpush1.bf16.msra.mxu0 %v1583
  %2388 = vmatprep.subr.bf16.mxu0 %v1590
  %2389 = vmatpush1.bf16.msra.mxu0 %v1589
  %2390 = vmatprep.subr.bf16.mxu0 %v1596
  %2391 = vmatpush1.bf16.msra.mxu0 %v1595
  %2392 = vmatprep.subr.bf16.mxu0 %v1602
  %2393 = vmatpush1.bf16.msra.mxu0 %v1601
  %2394 = vmatprep.subr.bf16.mxu0 %v1608
  %2395 = vmatpush1.bf16.msra.mxu0 %v1607
  %2396 = vmatprep.mubr.bf16.mxu0 %v532
  %2397 = vmatmul.mubr.bf16.gmra.mrb[0].mxu0 %v531
  %v2398 = vpop.f32.mrb[0].mxu0
  %v2399 = vadd.f32 %v2346, %v2398
  %v2400 = vpop.f32.mrb[0].mxu0
  %v2401 = vadd.f32 %v2348, %v2400
  %v2402 = vpop.f32.mrb[0].mxu0
  %v2403 = vadd.f32 %v2350, %v2402
  %v2404 = vpop.f32.mrb[0].mxu0
  %v2405 = vadd.f32 %v2352, %v2404
  %2406 = vmatprep.mubr.bf16.mxu0 %v538
  %2407 = vmatmul.mubr.bf16.gmra.mrb[0].mxu0 %v537
  %v2408 = vpop.f32.mrb[0].mxu0
  %v2409 = vadd.f32 %v2356, %v2408
  %v2410 = vpop.f32.mrb[0].mxu0
  %v2411 = vadd.f32 %v2358, %v2410
  %v2412 = vpop.f32.mrb[0].mxu0
  %v2413 = vadd.f32 %v2360, %v2412
  %v2414 = vpop.f32.mrb[0].mxu0
  %v2415 = vadd.f32 %v2362, %v2414
  %2416 = vdwg.mxu0
  %2417 = vmatprep.subr.bf16.mxu0 %v1614
  %2418 = vmatpush1.bf16.msra.mxu0 %v1613
  %2419 = vmatprep.subr.bf16.mxu0 %v1620
  %2420 = vmatpush1.bf16.msra.mxu0 %v1619
  %2421 = vmatprep.subr.bf16.mxu0 %v1626
  %2422 = vmatpush1.bf16.msra.mxu0 %v1625
  %2423 = vmatprep.subr.bf16.mxu0 %v1632
  %2424 = vmatpush1.bf16.msra.mxu0 %v1631
  %2425 = vmatprep.subr.bf16.mxu0 %v1638
  %2426 = vmatpush1.bf16.msra.mxu0 %v1637
  %2427 = vmatprep.subr.bf16.mxu0 %v1644
  %2428 = vmatpush1.bf16.msra.mxu0 %v1643
  %2429 = vmatprep.subr.bf16.mxu0 %v1650
  %2430 = vmatpush1.bf16.msra.mxu0 %v1649
  %2431 = vmatprep.subr.bf16.mxu0 %v1656
  %2432 = vmatpush1.bf16.msra.mxu0 %v1655
  %2433 = vmatprep.subr.bf16.mxu0 %v1662
  %2434 = vmatpush1.bf16.msra.mxu0 %v1661
  %2435 = vmatprep.subr.bf16.mxu0 %v1668
  %2436 = vmatpush1.bf16.msra.mxu0 %v1667
  %2437 = vmatprep.subr.bf16.mxu0 %v1674
  %2438 = vmatpush1.bf16.msra.mxu0 %v1673
  %2439 = vmatprep.subr.bf16.mxu0 %v1680
  %2440 = vmatpush1.bf16.msra.mxu0 %v1679
  %2441 = vmatprep.subr.bf16.mxu0 %v1686
  %2442 = vmatpush1.bf16.msra.mxu0 %v1685
  %2443 = vmatprep.subr.bf16.mxu0 %v1692
  %2444 = vmatpush1.bf16.msra.mxu0 %v1691
  %2445 = vmatprep.subr.bf16.mxu0 %v1698
  %2446 = vmatpush1.bf16.msra.mxu0 %v1697
  %2447 = vmatprep.subr.bf16.mxu0 %v1704
  %2448 = vmatpush1.bf16.msra.mxu0 %v1703
  %2449 = vmatprep.mubr.bf16.mxu0 %v534
  %2450 = vmatmul.mubr.bf16.gmra.mrb[0].mxu0 %v533
  %v2451 = vpop.f32.mrb[0].mxu0
  %v2452 = vadd.f32 %v2399, %v2451
  %v2453 = vpop.f32.mrb[0].mxu0
  %v2454 = vadd.f32 %v2401, %v2453
  %v2455 = vpop.f32.mrb[0].mxu0
  %v2456 = vadd.f32 %v2403, %v2455
  %v2457 = vpop.f32.mrb[0].mxu0
  %v2458 = vadd.f32 %v2405, %v2457
  %2459 = vmatprep.mubr.bf16.mxu0 %v540
  %2460 = vmatmul.mubr.bf16.gmra.mrb[0].mxu0 %v539
  %v2461 = vpop.f32.mrb[0].mxu0
  %v2462 = vadd.f32 %v2409, %v2461
  %v2463 = vpop.f32.mrb[0].mxu0
  %v2464 = vadd.f32 %v2411, %v2463
  %v2465 = vpop.f32.mrb[0].mxu0
  %v2466 = vadd.f32 %v2413, %v2465
  %v2467 = vpop.f32.mrb[0].mxu0
  %v2468 = vadd.f32 %v2415, %v2467
  %2469 = vdwg.mxu0
  %v2470 = vadd.f32 %v2134, %v2136
  %v2471 = vadd.f32 %v2470, %v2293
  %v2472 = vadd.f32 %v2471, %v2295
  %v2473 = vadd.f32 %v2472, %v2452
  %v2474 = vadd.f32 %v2473, %v2454
  %2475 = vadd.xlane.f32.xlu0 %v2474
  %v2476 = vpop.xlane.xlu0 %2475
  %v2477 = vadd.f32 %v2138, %v2140
  %v2478 = vadd.f32 %v2477, %v2297
  %v2479 = vadd.f32 %v2478, %v2299
  %v2480 = vadd.f32 %v2479, %v2456
  %v2481 = vadd.f32 %v2480, %v2458
  %2482 = vadd.xlane.f32.xlu0 %v2481
  %v2483 = vpop.xlane.xlu0 %2482
  %v2484 = vadd.f32 %v2144, %v2146
  %v2485 = vadd.f32 %v2484, %v2303
  %v2486 = vadd.f32 %v2485, %v2305
  %v2487 = vadd.f32 %v2486, %v2462
  %v2488 = vadd.f32 %v2487, %v2464
  %2489 = vadd.xlane.f32.xlu0 %v2488
  %v2490 = vpop.xlane.xlu0 %2489
  %v2491 = vadd.f32 %v2148, %v2150
  %v2492 = vadd.f32 %v2491, %v2307
  %v2493 = vadd.f32 %v2492, %v2309
  %v2494 = vadd.f32 %v2493, %v2466
  %v2495 = vadd.f32 %v2494, %v2468
  %2496 = vadd.xlane.f32.xlu0 %v2495
  %v2497 = vpop.xlane.xlu0 %2496
  %v2498 = vrcp.pop 768.0
  %v2499 = vmul.f32 %v2476, %v2498
  %v2500 = vmul.f32 %v2483, %v2498
  %v2501 = vmul.f32 %v2490, %v2498
  %v2502 = vmul.f32 %v2497, %v2498
  %v2503 = vsub.f32 %v2134, %v2499
  %v2504 = vsub.f32 %v2136, %v2499
  %v2505 = vsub.f32 %v2293, %v2499
  %v2506 = vsub.f32 %v2295, %v2499
  %v2507 = vsub.f32 %v2452, %v2499
  %v2508 = vsub.f32 %v2454, %v2499
  %v2509 = vsub.f32 %v2138, %v2500
  %v2510 = vsub.f32 %v2140, %v2500
  %v2511 = vsub.f32 %v2297, %v2500
  %v2512 = vsub.f32 %v2299, %v2500
  %v2513 = vsub.f32 %v2456, %v2500
  %v2514 = vsub.f32 %v2458, %v2500
  %v2515 = vsub.f32 %v2144, %v2501
  %v2516 = vsub.f32 %v2146, %v2501
  %v2517 = vsub.f32 %v2303, %v2501
  %v2518 = vsub.f32 %v2305, %v2501
  %v2519 = vsub.f32 %v2462, %v2501
  %v2520 = vsub.f32 %v2464, %v2501
  %v2521 = vsub.f32 %v2148, %v2502
  %v2522 = vsub.f32 %v2150, %v2502
  %v2523 = vsub.f32 %v2307, %v2502
  %v2524 = vsub.f32 %v2309, %v2502
  %v2525 = vsub.f32 %v2466, %v2502
  %v2526 = vsub.f32 %v2468, %v2502
  %v2527 = vmul.f32 %v2503, %v2503
  %v2528 = vmul.f32 %v2504, %v2504
  %v2529 = vmul.f32 %v2505, %v2505
  %v2530 = vmul.f32 %v2506, %v2506
  %v2531 = vmul.f32 %v2507, %v2507
  %v2532 = vmul.f32 %v2508, %v2508
  %v2533 = vmul.f32 %v2509, %v2509
  %v2534 = vmul.f32 %v2510, %v2510
  %v2535 = vmul.f32 %v2511, %v2511
  %v2536 = vmul.f32 %v2512, %v2512
  %v2537 = vmul.f32 %v2513, %v2513
  %v2538 = vmul.f32 %v2514, %v2514
  %v2539 = vmul.f32 %v2515, %v2515
  %v2540 = vmul.f32 %v2516, %v2516
  %v2541 = vmul.f32 %v2517, %v2517
  %v2542 = vmul.f32 %v2518, %v2518
  %v2543 = vmul.f32 %v2519, %v2519
  %v2544 = vmul.f32 %v2520, %v2520
  %v2545 = vmul.f32 %v2521, %v2521
  %v2546 = vmul.f32 %v2522, %v2522
  %v2547 = vmul.f32 %v2523, %v2523
  %v2548 = vmul.f32 %v2524, %v2524
  %v2549 = vmul.f32 %v2525, %v2525
  %v2550 = vmul.f32 %v2526, %v2526
  %v2551 = vadd.f32 %v2527, %v2528
  %v2552 = vadd.f32 %v2551, %v2529
  %v2553 = vadd.f32 %v2552, %v2530
  %v2554 = vadd.f32 %v2553, %v2531
  %v2555 = vadd.f32 %v2554, %v2532
  %2556 = vadd.xlane.f32.xlu0 %v2555
  %v2557 = vpop.xlane.xlu0 %2556
  %v2558 = vadd.f32 %v2533, %v2534
  %v2559 = vadd.f32 %v2558, %v2535
  %v2560 = vadd.f32 %v2559, %v2536
  %v2561 = vadd.f32 %v2560, %v2537
  %v2562 = vadd.f32 %v2561, %v2538
  %2563 = vadd.xlane.f32.xlu0 %v2562
  %v2564 = vpop.xlane.xlu0 %2563
  %v2565 = vadd.f32 %v2539, %v2540
  %v2566 = vadd.f32 %v2565, %v2541
  %v2567 = vadd.f32 %v2566, %v2542
  %v2568 = vadd.f32 %v2567, %v2543
  %v2569 = vadd.f32 %v2568, %v2544
  %2570 = vadd.xlane.f32.xlu0 %v2569
  %v2571 = vpop.xlane.xlu0 %2570
  %v2572 = vadd.f32 %v2545, %v2546
  %v2573 = vadd.f32 %v2572, %v2547
  %v2574 = vadd.f32 %v2573, %v2548
  %v2575 = vadd.f32 %v2574, %v2549
  %v2576 = vadd.f32 %v2575, %v2550
  %2577 = vadd.xlane.f32.xlu0 %v2576
  %v2578 = vpop.xlane.xlu0 %2577
  %v2579 = vmul.f32 %v2557, %v2498
  %v2580 = vmul.f32 %v2564, %v2498
  %v2581 = vmul.f32 %v2571, %v2498
  %v2582 = vmul.f32 %v2578, %v2498
  %v2583 = vadd.f32 %v2579, 1e-06
  %v2584 = vadd.f32 %v2580, 1e-06
  %v2585 = vadd.f32 %v2581, 1e-06
  %v2586 = vadd.f32 %v2582, 1e-06
  %v2587 = vrsqrt.pop %v2583
  %v2588 = vrsqrt.pop %v2584
  %v2589 = vrsqrt.pop %v2585
  %v2590 = vrsqrt.pop %v2586
  %v2591 = vmul.f32 %v2503, %v2587
  %v2592 = vmul.f32 %v2504, %v2587
  %v2593 = vmul.f32 %v2505, %v2587
  %v2594 = vmul.f32 %v2506, %v2587
  %v2595 = vmul.f32 %v2507, %v2587
  %v2596 = vmul.f32 %v2508, %v2587
  %v2597 = vmul.f32 %v2509, %v2588
  %v2598 = vmul.f32 %v2510, %v2588
  %v2599 = vmul.f32 %v2511, %v2588
  %v2600 = vmul.f32 %v2512, %v2588
  %v2601 = vmul.f32 %v2513, %v2588
  %v2602 = vmul.f32 %v2514, %v2588
  %v2603 = vmul.f32 %v2515, %v2589
  %v2604 = vmul.f32 %v2516, %v2589
  %v2605 = vmul.f32 %v2517, %v2589
  %v2606 = vmul.f32 %v2518, %v2589
  %v2607 = vmul.f32 %v2519, %v2589
  %v2608 = vmul.f32 %v2520, %v2589
  %v2609 = vmul.f32 %v2521, %v2590
  %v2610 = vmul.f32 %v2522, %v2590
  %v2611 = vmul.f32 %v2523, %v2590
  %v2612 = vmul.f32 %v2524, %v2590
  %v2613 = vmul.f32 %v2525, %v2590
  %v2614 = vmul.f32 %v2526, %v2590
  %v2615 = vpack.c.bf16 %v2597, %v2591
  %v2616 = vpack.c.bf16 %v2598, %v2592
  %v2617 = vpack.c.bf16 %v2599, %v2593
  %v2618 = vpack.c.bf16 %v2600, %v2594
  %v2619 = vpack.c.bf16 %v2601, %v2595
  %v2620 = vpack.c.bf16 %v2602, %v2596
  %v2621 = vpack.c.bf16 %v2609, %v2603
  %v2622 = vpack.c.bf16 %v2610, %v2604
  %v2623 = vpack.c.bf16 %v2611, %v2605
  %v2624 = vpack.c.bf16 %v2612, %v2606
  %v2625 = vpack.c.bf16 %v2613, %v2607
  %v2626 = vpack.c.bf16 %v2614, %v2608
  %vm2627 = vcmask 261120
  %v2629 = vsel %vm2627, %v42, 0
  %2631 = vmatprep.subr.bf16.mxu0 %v2616
  %2632 = vmatpush1.bf16.msra.mxu0 %v2615
  %2633 = vmatprep.subr.bf16.mxu0 %v2622
  %2634 = vmatpush1.bf16.msra.mxu0 %v2621
  %2635 = vmatprep.subr.bf16.mxu0 0
  %2636 = vmatpush1.bf16.msra.mxu0 0
  %2637 = vmatprep.subr.bf16.mxu0 0
  %2638 = vmatpush1.bf16.msra.mxu0 0
  %2639 = vmatprep.subr.bf16.mxu0 0
  %2640 = vmatpush1.bf16.msra.mxu0 0
  %2641 = vmatprep.subr.bf16.mxu0 0
  %2642 = vmatpush1.bf16.msra.mxu0 0
  %2643 = vmatprep.subr.bf16.mxu0 0
  %2644 = vmatpush1.bf16.msra.mxu0 0
  %2645 = vmatprep.subr.bf16.mxu0 0
  %2646 = vmatpush1.bf16.msra.mxu0 0
  %2647 = vmatprep.subr.bf16.mxu0 0
  %2648 = vmatpush1.bf16.msra.mxu0 0
  %2649 = vmatprep.subr.bf16.mxu0 0
  %2650 = vmatpush1.bf16.msra.mxu0 0
  %2651 = vmatprep.subr.bf16.mxu0 0
  %2652 = vmatpush1.bf16.msra.mxu0 0
  %2653 = vmatprep.subr.bf16.mxu0 0
  %2654 = vmatpush1.bf16.msra.mxu0 0
  %2655 = vmatprep.subr.bf16.mxu0 0
  %2656 = vmatpush1.bf16.msra.mxu0 0
  %2657 = vmatprep.subr.bf16.mxu0 0
  %2658 = vmatpush1.bf16.msra.mxu0 0
  %2659 = vmatprep.subr.bf16.mxu0 0
  %2660 = vmatpush1.bf16.msra.mxu0 0
  %2661 = vmatprep.subr.bf16.mxu0 0
  %2662 = vmatpush1.bf16.msra.mxu0 0
  %2663 = vmatprep.mubr.bf16.mxu0 0
  %2664 = vmatmul.mubr.bf16.gmra.mrb[0].mxu0 %v2629
  %v2665 = vpop.f32.mrb[0].mxu0
  %v2666 = vadd.f32 0.0, %v2665
  %v2667 = vpop.f32.mrb[0].mxu0
  %v2668 = vadd.f32 0.0, %v2667
  %v2669 = vpop.f32.mrb[0].mxu0
  %v2670 = vpop.f32.mrb[0].mxu0
  %2671 = vdwg.mxu0
  %2672 = vmatprep.subr.bf16.mxu0 %v2618
  %2673 = vmatpush1.bf16.msra.mxu0 %v2617
  %2674 = vmatprep.subr.bf16.mxu0 %v2624
  %2675 = vmatpush1.bf16.msra.mxu0 %v2623
  %2676 = vmatprep.subr.bf16.mxu0 0
  %2677 = vmatpush1.bf16.msra.mxu0 0
  %2678 = vmatprep.subr.bf16.mxu0 0
  %2679 = vmatpush1.bf16.msra.mxu0 0
  %2680 = vmatprep.subr.bf16.mxu0 0
  %2681 = vmatpush1.bf16.msra.mxu0 0
  %2682 = vmatprep.subr.bf16.mxu0 0
  %2683 = vmatpush1.bf16.msra.mxu0 0
  %2684 = vmatprep.subr.bf16.mxu0 0
  %2685 = vmatpush1.bf16.msra.mxu0 0
  %2686 = vmatprep.subr.bf16.mxu0 0
  %2687 = vmatpush1.bf16.msra.mxu0 0
  %2688 = vmatprep.subr.bf16.mxu0 0
  %2689 = vmatpush1.bf16.msra.mxu0 0
  %2690 = vmatprep.subr.bf16.mxu0 0
  %2691 = vmatpush1.bf16.msra.mxu0 0
  %2692 = vmatprep.subr.bf16.mxu0 0
  %2693 = vmatpush1.bf16.msra.mxu0 0
  %2694 = vmatprep.subr.bf16.mxu0 0
  %2695 = vmatpush1.bf16.msra.mxu0 0
  %2696 = vmatprep.subr.bf16.mxu0 0
  %2697 = vmatpush1.bf16.msra.mxu0 0
  %2698 = vmatprep.subr.bf16.mxu0 0
  %2699 = vmatpush1.bf16.msra.mxu0 0
  %2700 = vmatprep.subr.bf16.mxu0 0
  %2701 = vmatpush1.bf16.msra.mxu0 0
  %2702 = vmatprep.subr.bf16.mxu0 0
  %2703 = vmatpush1.bf16.msra.mxu0 0
  %2704 = vmatprep.mubr.bf16.mxu0 0
  %2705 = vmatmul.mubr.bf16.gmra.mrb[0].mxu0 %v2629
  %v2706 = vpop.f32.mrb[0].mxu0
  %v2707 = vadd.f32 0.0, %v2706
  %v2708 = vpop.f32.mrb[0].mxu0
  %v2709 = vadd.f32 0.0, %v2708
  %v2710 = vpop.f32.mrb[0].mxu0
  %v2711 = vpop.f32.mrb[0].mxu0
  %2712 = vdwg.mxu0
  %2713 = vmatprep.subr.bf16.mxu0 %v2620
  %2714 = vmatpush1.bf16.msra.mxu0 %v2619
  %2715 = vmatprep.subr.bf16.mxu0 %v2626
  %2716 = vmatpush1.bf16.msra.mxu0 %v2625
  %2717 = vmatprep.subr.bf16.mxu0 0
  %2718 = vmatpush1.bf16.msra.mxu0 0
  %2719 = vmatprep.subr.bf16.mxu0 0
  %2720 = vmatpush1.bf16.msra.mxu0 0
  %2721 = vmatprep.subr.bf16.mxu0 0
  %2722 = vmatpush1.bf16.msra.mxu0 0
  %2723 = vmatprep.subr.bf16.mxu0 0
  %2724 = vmatpush1.bf16.msra.mxu0 0
  %2725 = vmatprep.subr.bf16.mxu0 0
  %2726 = vmatpush1.bf16.msra.mxu0 0
  %2727 = vmatprep.subr.bf16.mxu0 0
  %2728 = vmatpush1.bf16.msra.mxu0 0
  %2729 = vmatprep.subr.bf16.mxu0 0
  %2730 = vmatpush1.bf16.msra.mxu0 0
  %2731 = vmatprep.subr.bf16.mxu0 0
  %2732 = vmatpush1.bf16.msra.mxu0 0
  %2733 = vmatprep.subr.bf16.mxu0 0
  %2734 = vmatpush1.bf16.msra.mxu0 0
  %2735 = vmatprep.subr.bf16.mxu0 0
  %2736 = vmatpush1.bf16.msra.mxu0 0
  %2737 = vmatprep.subr.bf16.mxu0 0
  %2738 = vmatpush1.bf16.msra.mxu0 0
  %2739 = vmatprep.subr.bf16.mxu0 0
  %2740 = vmatpush1.bf16.msra.mxu0 0
  %2741 = vmatprep.subr.bf16.mxu0 0
  %2742 = vmatpush1.bf16.msra.mxu0 0
  %2743 = vmatprep.subr.bf16.mxu0 0
  %2744 = vmatpush1.bf16.msra.mxu0 0
  %2745 = vmatprep.mubr.bf16.mxu0 0
  %2746 = vmatmul.mubr.bf16.gmra.mrb[0].mxu0 %v2629
  %v2747 = vpop.f32.mrb[0].mxu0
  %v2748 = vadd.f32 0.0, %v2747
  %v2749 = vpop.f32.mrb[0].mxu0
  %v2750 = vadd.f32 0.0, %v2749
  %v2751 = vpop.f32.mrb[0].mxu0
  %v2752 = vpop.f32.mrb[0].mxu0
  %2753 = vdwg.mxu0
  %v2754 = vpack.c.bf16 %v2666, %v2666
  %v2755 = vpack.c.bf16 %v2668, %v2668
  %v2756 = vpack.c.bf16 %v2707, %v2707
  %v2757 = vpack.c.bf16 %v2709, %v2709
  %v2758 = vpack.c.bf16 %v2748, %v2748
  %v2759 = vpack.c.bf16 %v2750, %v2750
  %v2761 = vlaneseq
  %v2762 = vshrl.u32 %v2761, 7
  %v2763 = vsub.s32 0, %v2762
  %v2764 = vrot.slane %v428, %v2763
  %v2765 = vlaneseq
  %v2766 = vshrl.u32 %v2765, 7
  %v2767 = vsub.s32 1, %v2766
  %v2768 = vrot.slane %v428, %v2767
  %v2867 = vunpack.c.l.b16 %v332
  %v2868 = vunpack.c.h.b16 %v332
  %v2869 = vunpack.c.l.b16 %v333
  %v2870 = vunpack.c.h.b16 %v333
  %v2871 = vunpack.c.l.b16 %v334
  %v2872 = vunpack.c.h.b16 %v334
  %v2873 = vunpack.c.l.b16 %v335
  %v2874 = vunpack.c.h.b16 %v335
  %v2875 = vunpack.c.l.b16 %v336
  %v2876 = vunpack.c.h.b16 %v336
  %v2877 = vunpack.c.l.b16 %v337
  %v2878 = vunpack.c.h.b16 %v337
  %v2879 = vunpack.c.l.b16 %v338
  %v2880 = vunpack.c.h.b16 %v338
  %v2881 = vunpack.c.l.b16 %v339
  %v2882 = vunpack.c.h.b16 %v339
  %v2883 = vunpack.c.l.b16 %v340
  %v2884 = vunpack.c.h.b16 %v340
  %v2885 = vunpack.c.l.b16 %v341
  %v2886 = vunpack.c.h.b16 %v341
  %v2887 = vunpack.c.l.b16 %v342
  %v2888 = vunpack.c.h.b16 %v342
  %v2889 = vunpack.c.l.b16 %v343
  %v2890 = vunpack.c.h.b16 %v343
  %v2891 = vunpack.c.l.b16 %v344
  %v2892 = vunpack.c.h.b16 %v344
  %v2893 = vunpack.c.l.b16 %v345
  %v2894 = vunpack.c.h.b16 %v345
  %v2895 = vunpack.c.l.b16 %v346
  %v2896 = vunpack.c.h.b16 %v346
  %v2897 = vunpack.c.l.b16 %v347
  %v2898 = vunpack.c.h.b16 %v347
  %v2899 = vunpack.c.l.b16 %v348
  %v2900 = vunpack.c.h.b16 %v348
  %v2901 = vunpack.c.l.b16 %v349
  %v2902 = vunpack.c.h.b16 %v349
  %v2903 = vunpack.c.l.b16 %v350
  %v2904 = vunpack.c.h.b16 %v350
  %v2905 = vunpack.c.l.b16 %v351
  %v2906 = vunpack.c.h.b16 %v351
  %v2907 = vunpack.c.l.b16 %v352
  %v2908 = vunpack.c.h.b16 %v352
  %v2909 = vunpack.c.l.b16 %v353
  %v2910 = vunpack.c.h.b16 %v353
  %v2911 = vunpack.c.l.b16 %v354
  %v2912 = vunpack.c.h.b16 %v354
  %v2913 = vunpack.c.l.b16 %v355
  %v2914 = vunpack.c.h.b16 %v355
  %v2915 = vunpack.c.l.b16 %v356
  %v2916 = vunpack.c.h.b16 %v356
  %v2917 = vunpack.c.l.b16 %v357
  %v2918 = vunpack.c.h.b16 %v357
  %v2919 = vunpack.c.l.b16 %v358
  %v2920 = vunpack.c.h.b16 %v358
  %v2921 = vunpack.c.l.b16 %v359
  %v2922 = vunpack.c.h.b16 %v359
  %v2923 = vunpack.c.l.b16 %v360
  %v2924 = vunpack.c.h.b16 %v360
  %v2925 = vunpack.c.l.b16 %v361
  %v2926 = vunpack.c.h.b16 %v361
  %v2927 = vunpack.c.l.b16 %v362
  %v2928 = vunpack.c.h.b16 %v362
  %v2929 = vunpack.c.l.b16 %v363
  %v2930 = vunpack.c.h.b16 %v363
  %v2931 = vunpack.c.l.b16 %v364
  %v2932 = vunpack.c.h.b16 %v364
  %v2933 = vunpack.c.l.b16 %v365
  %v2934 = vunpack.c.h.b16 %v365
  %v2935 = vunpack.c.l.b16 %v366
  %v2936 = vunpack.c.h.b16 %v366
  %v2937 = vunpack.c.l.b16 %v367
  %v2938 = vunpack.c.h.b16 %v367
  %v2939 = vunpack.c.l.b16 %v368
  %v2940 = vunpack.c.h.b16 %v368
  %v2941 = vunpack.c.l.b16 %v369
  %v2942 = vunpack.c.h.b16 %v369
  %v2943 = vunpack.c.l.b16 %v370
  %v2944 = vunpack.c.h.b16 %v370
  %v2945 = vunpack.c.l.b16 %v371
  %v2946 = vunpack.c.h.b16 %v371
  %v2947 = vunpack.c.l.b16 %v372
  %v2948 = vunpack.c.h.b16 %v372
  %v2949 = vunpack.c.l.b16 %v373
  %v2950 = vunpack.c.h.b16 %v373
  %v2951 = vunpack.c.l.b16 %v374
  %v2952 = vunpack.c.h.b16 %v374
  %v2953 = vunpack.c.l.b16 %v375
  %v2954 = vunpack.c.h.b16 %v375
  %v2955 = vunpack.c.l.b16 %v376
  %v2956 = vunpack.c.h.b16 %v376
  %v2957 = vunpack.c.l.b16 %v377
  %v2958 = vunpack.c.h.b16 %v377
  %v2959 = vunpack.c.l.b16 %v378
  %v2960 = vunpack.c.h.b16 %v378
  %v2961 = vunpack.c.l.b16 %v379
  %v2962 = vunpack.c.h.b16 %v379
  %v2963 = vunpack.c.l.b16 %v380
  %v2964 = vunpack.c.h.b16 %v380
  %v2965 = vunpack.c.l.b16 %v381
  %v2966 = vunpack.c.h.b16 %v381
  %v2967 = vunpack.c.l.b16 %v382
  %v2968 = vunpack.c.h.b16 %v382
  %v2969 = vunpack.c.l.b16 %v383
  %v2970 = vunpack.c.h.b16 %v383
  %v2971 = vunpack.c.l.b16 %v384
  %v2972 = vunpack.c.h.b16 %v384
  %v2973 = vunpack.c.l.b16 %v385
  %v2974 = vunpack.c.h.b16 %v385
  %v2975 = vunpack.c.l.b16 %v386
  %v2976 = vunpack.c.h.b16 %v386
  %v2977 = vunpack.c.l.b16 %v387
  %v2978 = vunpack.c.h.b16 %v387
  %v2979 = vunpack.c.l.b16 %v388
  %v2980 = vunpack.c.h.b16 %v388
  %v2981 = vunpack.c.l.b16 %v389
  %v2982 = vunpack.c.h.b16 %v389
  %v2983 = vunpack.c.l.b16 %v390
  %v2984 = vunpack.c.h.b16 %v390
  %v2985 = vunpack.c.l.b16 %v391
  %v2986 = vunpack.c.h.b16 %v391
  %v2987 = vunpack.c.l.b16 %v392
  %v2988 = vunpack.c.h.b16 %v392
  %v2989 = vunpack.c.l.b16 %v393
  %v2990 = vunpack.c.h.b16 %v393
  %v2991 = vunpack.c.l.b16 %v394
  %v2992 = vunpack.c.h.b16 %v394
  %v2993 = vunpack.c.l.b16 %v395
  %v2994 = vunpack.c.h.b16 %v395
  %v2995 = vunpack.c.l.b16 %v396
  %v2996 = vunpack.c.h.b16 %v396
  %v2997 = vunpack.c.l.b16 %v397
  %v2998 = vunpack.c.h.b16 %v397
  %v2999 = vunpack.c.l.b16 %v398
  %v3000 = vunpack.c.h.b16 %v398
  %v3001 = vunpack.c.l.b16 %v399
  %v3002 = vunpack.c.h.b16 %v399
  %v3003 = vunpack.c.l.b16 %v400
  %v3004 = vunpack.c.h.b16 %v400
  %v3005 = vunpack.c.l.b16 %v401
  %v3006 = vunpack.c.h.b16 %v401
  %v3007 = vunpack.c.l.b16 %v402
  %v3008 = vunpack.c.h.b16 %v402
  %v3009 = vunpack.c.l.b16 %v403
  %v3010 = vunpack.c.h.b16 %v403
  %v3011 = vunpack.c.l.b16 %v404
  %v3012 = vunpack.c.h.b16 %v404
  %v3013 = vunpack.c.l.b16 %v405
  %v3014 = vunpack.c.h.b16 %v405
  %v3015 = vunpack.c.l.b16 %v406
  %v3016 = vunpack.c.h.b16 %v406
  %v3017 = vunpack.c.l.b16 %v407
  %v3018 = vunpack.c.h.b16 %v407
  %v3019 = vunpack.c.l.b16 %v408
  %v3020 = vunpack.c.h.b16 %v408
  %v3021 = vunpack.c.l.b16 %v409
  %v3022 = vunpack.c.h.b16 %v409
  %v3023 = vunpack.c.l.b16 %v410
  %v3024 = vunpack.c.h.b16 %v410
  %v3025 = vunpack.c.l.b16 %v411
  %v3026 = vunpack.c.h.b16 %v411
  %v3027 = vunpack.c.l.b16 %v412
  %v3028 = vunpack.c.h.b16 %v412
  %v3029 = vunpack.c.l.b16 %v413
  %v3030 = vunpack.c.h.b16 %v413
  %v3031 = vunpack.c.l.b16 %v414
  %v3032 = vunpack.c.h.b16 %v414
  %v3033 = vunpack.c.l.b16 %v415
  %v3034 = vunpack.c.h.b16 %v415
  %v3035 = vunpack.c.l.b16 %v416
  %v3036 = vunpack.c.h.b16 %v416
  %v3037 = vunpack.c.l.b16 %v417
  %v3038 = vunpack.c.h.b16 %v417
  %v3039 = vunpack.c.l.b16 %v418
  %v3040 = vunpack.c.h.b16 %v418
  %v3041 = vunpack.c.l.b16 %v419
  %v3042 = vunpack.c.h.b16 %v419
  %v3043 = vunpack.c.l.b16 %v420
  %v3044 = vunpack.c.h.b16 %v420
  %v3045 = vunpack.c.l.b16 %v421
  %v3046 = vunpack.c.h.b16 %v421
  %v3047 = vunpack.c.l.b16 %v422
  %v3048 = vunpack.c.h.b16 %v422
  %v3049 = vunpack.c.l.b16 %v423
  %v3050 = vunpack.c.h.b16 %v423
  %v3051 = vunpack.c.l.b16 %v424
  %v3052 = vunpack.c.h.b16 %v424
  %v3053 = vunpack.c.l.b16 %v425
  %v3054 = vunpack.c.h.b16 %v425
  %v3055 = vunpack.c.l.b16 %v426
  %v3056 = vunpack.c.h.b16 %v426
  %v3057 = vunpack.c.l.b16 %v427
  %v3058 = vunpack.c.h.b16 %v427
  %v3059 = vpack.c.b16 %v2869, %v2867
  %v3060 = vpack.c.b16 %v2870, %v2868
  %v3061 = vpack.c.b16 %v2873, %v2871
  %v3062 = vpack.c.b16 %v2874, %v2872
  %v3063 = vpack.c.b16 %v2877, %v2875
  %v3064 = vpack.c.b16 %v2878, %v2876
  %v3065 = vpack.c.b16 %v2881, %v2879
  %v3066 = vpack.c.b16 %v2882, %v2880
  %v3067 = vpack.c.b16 %v2885, %v2883
  %v3068 = vpack.c.b16 %v2886, %v2884
  %v3069 = vpack.c.b16 %v2889, %v2887
  %v3070 = vpack.c.b16 %v2890, %v2888
  %v3071 = vpack.c.b16 %v2893, %v2891
  %v3072 = vpack.c.b16 %v2894, %v2892
  %v3073 = vpack.c.b16 %v2897, %v2895
  %v3074 = vpack.c.b16 %v2898, %v2896
  %v3075 = vpack.c.b16 %v2901, %v2899
  %v3076 = vpack.c.b16 %v2902, %v2900
  %v3077 = vpack.c.b16 %v2905, %v2903
  %v3078 = vpack.c.b16 %v2906, %v2904
  %v3079 = vpack.c.b16 %v2909, %v2907
  %v3080 = vpack.c.b16 %v2910, %v2908
  %v3081 = vpack.c.b16 %v2913, %v2911
  %v3082 = vpack.c.b16 %v2914, %v2912
  %v3083 = vpack.c.b16 %v2917, %v2915
  %v3084 = vpack.c.b16 %v2918, %v2916
  %v3085 = vpack.c.b16 %v2921, %v2919
  %v3086 = vpack.c.b16 %v2922, %v2920
  %v3087 = vpack.c.b16 %v2925, %v2923
  %v3088 = vpack.c.b16 %v2926, %v2924
  %v3089 = vpack.c.b16 %v2929, %v2927
  %v3090 = vpack.c.b16 %v2930, %v2928
  %v3091 = vpack.c.b16 %v2933, %v2931
  %v3092 = vpack.c.b16 %v2934, %v2932
  %v3093 = vpack.c.b16 %v2937, %v2935
  %v3094 = vpack.c.b16 %v2938, %v2936
  %v3095 = vpack.c.b16 %v2941, %v2939
  %v3096 = vpack.c.b16 %v2942, %v2940
  %v3097 = vpack.c.b16 %v2945, %v2943
  %v3098 = vpack.c.b16 %v2946, %v2944
  %v3099 = vpack.c.b16 %v2949, %v2947
  %v3100 = vpack.c.b16 %v2950, %v2948
  %v3101 = vpack.c.b16 %v2953, %v2951
  %v3102 = vpack.c.b16 %v2954, %v2952
  %v3103 = vpack.c.b16 %v2957, %v2955
  %v3104 = vpack.c.b16 %v2958, %v2956
  %v3105 = vpack.c.b16 %v2961, %v2959
  %v3106 = vpack.c.b16 %v2962, %v2960
  %v3107 = vpack.c.b16 %v2965, %v2963
  %v3108 = vpack.c.b16 %v2966, %v2964
  %v3109 = vpack.c.b16 %v2969, %v2967
  %v3110 = vpack.c.b16 %v2970, %v2968
  %v3111 = vpack.c.b16 %v2973, %v2971
  %v3112 = vpack.c.b16 %v2974, %v2972
  %v3113 = vpack.c.b16 %v2977, %v2975
  %v3114 = vpack.c.b16 %v2978, %v2976
  %v3115 = vpack.c.b16 %v2981, %v2979
  %v3116 = vpack.c.b16 %v2982, %v2980
  %v3117 = vpack.c.b16 %v2985, %v2983
  %v3118 = vpack.c.b16 %v2986, %v2984
  %v3119 = vpack.c.b16 %v2989, %v2987
  %v3120 = vpack.c.b16 %v2990, %v2988
  %v3121 = vpack.c.b16 %v2993, %v2991
  %v3122 = vpack.c.b16 %v2994, %v2992
  %v3123 = vpack.c.b16 %v2997, %v2995
  %v3124 = vpack.c.b16 %v2998, %v2996
  %v3125 = vpack.c.b16 %v3001, %v2999
  %v3126 = vpack.c.b16 %v3002, %v3000
  %v3127 = vpack.c.b16 %v3005, %v3003
  %v3128 = vpack.c.b16 %v3006, %v3004
  %v3129 = vpack.c.b16 %v3009, %v3007
  %v3130 = vpack.c.b16 %v3010, %v3008
  %v3131 = vpack.c.b16 %v3013, %v3011
  %v3132 = vpack.c.b16 %v3014, %v3012
  %v3133 = vpack.c.b16 %v3017, %v3015
  %v3134 = vpack.c.b16 %v3018, %v3016
  %v3135 = vpack.c.b16 %v3021, %v3019
  %v3136 = vpack.c.b16 %v3022, %v3020
  %v3137 = vpack.c.b16 %v3025, %v3023
  %v3138 = vpack.c.b16 %v3026, %v3024
  %v3139 = vpack.c.b16 %v3029, %v3027
  %v3140 = vpack.c.b16 %v3030, %v3028
  %v3141 = vpack.c.b16 %v3033, %v3031
  %v3142 = vpack.c.b16 %v3034, %v3032
  %v3143 = vpack.c.b16 %v3037, %v3035
  %v3144 = vpack.c.b16 %v3038, %v3036
  %v3145 = vpack.c.b16 %v3041, %v3039
  %v3146 = vpack.c.b16 %v3042, %v3040
  %v3147 = vpack.c.b16 %v3045, %v3043
  %v3148 = vpack.c.b16 %v3046, %v3044
  %v3149 = vpack.c.b16 %v3049, %v3047
  %v3150 = vpack.c.b16 %v3050, %v3048
  %v3151 = vpack.c.b16 %v3053, %v3051
  %v3152 = vpack.c.b16 %v3054, %v3052
  %v3153 = vpack.c.b16 %v3057, %v3055
  %v3154 = vpack.c.b16 %v3058, %v3056
  %3251 = vmatprep.subr.bf16.mxu0 %v3060
  %3252 = vmatpush1.bf16.msra.mxu0 %v3059
  %3253 = vmatprep.subr.bf16.mxu0 %v3062
  %3254 = vmatpush1.bf16.msra.mxu0 %v3061
  %3255 = vmatprep.subr.bf16.mxu0 %v3064
  %3256 = vmatpush1.bf16.msra.mxu0 %v3063
  %3257 = vmatprep.subr.bf16.mxu0 %v3066
  %3258 = vmatpush1.bf16.msra.mxu0 %v3065
  %3259 = vmatprep.subr.bf16.mxu0 %v3068
  %3260 = vmatpush1.bf16.msra.mxu0 %v3067
  %3261 = vmatprep.subr.bf16.mxu0 %v3070
  %3262 = vmatpush1.bf16.msra.mxu0 %v3069
  %3263 = vmatprep.subr.bf16.mxu0 %v3072
  %3264 = vmatpush1.bf16.msra.mxu0 %v3071
  %3265 = vmatprep.subr.bf16.mxu0 %v3074
  %3266 = vmatpush1.bf16.msra.mxu0 %v3073
  %3267 = vmatprep.subr.bf16.mxu0 %v3076
  %3268 = vmatpush1.bf16.msra.mxu0 %v3075
  %3269 = vmatprep.subr.bf16.mxu0 %v3078
  %3270 = vmatpush1.bf16.msra.mxu0 %v3077
  %3271 = vmatprep.subr.bf16.mxu0 %v3080
  %3272 = vmatpush1.bf16.msra.mxu0 %v3079
  %3273 = vmatprep.subr.bf16.mxu0 %v3082
  %3274 = vmatpush1.bf16.msra.mxu0 %v3081
  %3275 = vmatprep.subr.bf16.mxu0 %v3084
  %3276 = vmatpush1.bf16.msra.mxu0 %v3083
  %3277 = vmatprep.subr.bf16.mxu0 %v3086
  %3278 = vmatpush1.bf16.msra.mxu0 %v3085
  %3279 = vmatprep.subr.bf16.mxu0 %v3088
  %3280 = vmatpush1.bf16.msra.mxu0 %v3087
  %3281 = vmatprep.subr.bf16.mxu0 %v3090
  %3282 = vmatpush1.bf16.msra.mxu0 %v3089
  %3283 = vmatprep.mubr.bf16.mxu0 %v2755
  %3284 = vmatmul.mubr.bf16.gmra.mrb[0].mxu0 %v2754
  %v3285 = vpop.f32.mrb[0].mxu0
  %v3286 = vadd.f32 %v2764, %v3285
  %v3287 = vpop.f32.mrb[0].mxu0
  %v3288 = vadd.f32 %v2768, %v3287
  %v3289 = vpop.f32.mrb[0].mxu0
  %v3290 = vpop.f32.mrb[0].mxu0
  %3291 = vdwg.mxu0
  %3292 = vmatprep.subr.bf16.mxu0 %v3092
  %3293 = vmatpush1.bf16.msra.mxu0 %v3091
  %3294 = vmatprep.subr.bf16.mxu0 %v3094
  %3295 = vmatpush1.bf16.msra.mxu0 %v3093
  %3296 = vmatprep.subr.bf16.mxu0 %v3096
  %3297 = vmatpush1.bf16.msra.mxu0 %v3095
  %3298 = vmatprep.subr.bf16.mxu0 %v3098
  %3299 = vmatpush1.bf16.msra.mxu0 %v3097
  %3300 = vmatprep.subr.bf16.mxu0 %v3100
  %3301 = vmatpush1.bf16.msra.mxu0 %v3099
  %3302 = vmatprep.subr.bf16.mxu0 %v3102
  %3303 = vmatpush1.bf16.msra.mxu0 %v3101
  %3304 = vmatprep.subr.bf16.mxu0 %v3104
  %3305 = vmatpush1.bf16.msra.mxu0 %v3103
  %3306 = vmatprep.subr.bf16.mxu0 %v3106
  %3307 = vmatpush1.bf16.msra.mxu0 %v3105
  %3308 = vmatprep.subr.bf16.mxu0 %v3108
  %3309 = vmatpush1.bf16.msra.mxu0 %v3107
  %3310 = vmatprep.subr.bf16.mxu0 %v3110
  %3311 = vmatpush1.bf16.msra.mxu0 %v3109
  %3312 = vmatprep.subr.bf16.mxu0 %v3112
  %3313 = vmatpush1.bf16.msra.mxu0 %v3111
  %3314 = vmatprep.subr.bf16.mxu0 %v3114
  %3315 = vmatpush1.bf16.msra.mxu0 %v3113
  %3316 = vmatprep.subr.bf16.mxu0 %v3116
  %3317 = vmatpush1.bf16.msra.mxu0 %v3115
  %3318 = vmatprep.subr.bf16.mxu0 %v3118
  %3319 = vmatpush1.bf16.msra.mxu0 %v3117
  %3320 = vmatprep.subr.bf16.mxu0 %v3120
  %3321 = vmatpush1.bf16.msra.mxu0 %v3119
  %3322 = vmatprep.subr.bf16.mxu0 %v3122
  %3323 = vmatpush1.bf16.msra.mxu0 %v3121
  %3324 = vmatprep.mubr.bf16.mxu0 %v2757
  %3325 = vmatmul.mubr.bf16.gmra.mrb[0].mxu0 %v2756
  %v3326 = vpop.f32.mrb[0].mxu0
  %v3327 = vadd.f32 %v3286, %v3326
  %v3328 = vpop.f32.mrb[0].mxu0
  %v3329 = vadd.f32 %v3288, %v3328
  %v3330 = vpop.f32.mrb[0].mxu0
  %v3331 = vpop.f32.mrb[0].mxu0
  %3332 = vdwg.mxu0
  %3333 = vmatprep.subr.bf16.mxu0 %v3124
  %3334 = vmatpush1.bf16.msra.mxu0 %v3123
  %3335 = vmatprep.subr.bf16.mxu0 %v3126
  %3336 = vmatpush1.bf16.msra.mxu0 %v3125
  %3337 = vmatprep.subr.bf16.mxu0 %v3128
  %3338 = vmatpush1.bf16.msra.mxu0 %v3127
  %3339 = vmatprep.subr.bf16.mxu0 %v3130
  %3340 = vmatpush1.bf16.msra.mxu0 %v3129
  %3341 = vmatprep.subr.bf16.mxu0 %v3132
  %3342 = vmatpush1.bf16.msra.mxu0 %v3131
  %3343 = vmatprep.subr.bf16.mxu0 %v3134
  %3344 = vmatpush1.bf16.msra.mxu0 %v3133
  %3345 = vmatprep.subr.bf16.mxu0 %v3136
  %3346 = vmatpush1.bf16.msra.mxu0 %v3135
  %3347 = vmatprep.subr.bf16.mxu0 %v3138
  %3348 = vmatpush1.bf16.msra.mxu0 %v3137
  %3349 = vmatprep.subr.bf16.mxu0 %v3140
  %3350 = vmatpush1.bf16.msra.mxu0 %v3139
  %3351 = vmatprep.subr.bf16.mxu0 %v3142
  %3352 = vmatpush1.bf16.msra.mxu0 %v3141
  %3353 = vmatprep.subr.bf16.mxu0 %v3144
  %3354 = vmatpush1.bf16.msra.mxu0 %v3143
  %3355 = vmatprep.subr.bf16.mxu0 %v3146
  %3356 = vmatpush1.bf16.msra.mxu0 %v3145
  %3357 = vmatprep.subr.bf16.mxu0 %v3148
  %3358 = vmatpush1.bf16.msra.mxu0 %v3147
  %3359 = vmatprep.subr.bf16.mxu0 %v3150
  %3360 = vmatpush1.bf16.msra.mxu0 %v3149
  %3361 = vmatprep.subr.bf16.mxu0 %v3152
  %3362 = vmatpush1.bf16.msra.mxu0 %v3151
  %3363 = vmatprep.subr.bf16.mxu0 %v3154
  %3364 = vmatpush1.bf16.msra.mxu0 %v3153
  %3365 = vmatprep.mubr.bf16.mxu0 %v2759
  %3366 = vmatmul.mubr.bf16.gmra.mrb[0].mxu0 %v2758
  %v3367 = vpop.f32.mrb[0].mxu0
  %v3368 = vadd.f32 %v3327, %v3367
  %v3369 = vpop.f32.mrb[0].mxu0
  %v3370 = vadd.f32 %v3329, %v3369
  %v3371 = vpop.f32.mrb[0].mxu0
  %v3372 = vpop.f32.mrb[0].mxu0
  %3373 = vdwg.mxu0
  %v3374 = vmax.f32 %v3368, 0.0
  %v3375 = vmax.f32 %v3370, 0.0
  %v3376 = vpack.c.bf16 %v3374, %v3374
  %v3377 = vpack.c.bf16 %v3375, %v3375
  %v3379 = vlaneseq
  %v3380 = vshrl.u32 %v3379, 7
  %v3381 = vsub.s32 0, %v3380
  %v3382 = vrot.slane %v461, %v3381
  %v3416 = vunpack.c.l.b16 %v429
  %v3417 = vunpack.c.l.b16 %v430
  %v3418 = vunpack.c.l.b16 %v431
  %v3419 = vunpack.c.l.b16 %v432
  %v3420 = vunpack.c.l.b16 %v433
  %v3421 = vunpack.c.l.b16 %v434
  %v3422 = vunpack.c.l.b16 %v435
  %v3423 = vunpack.c.l.b16 %v436
  %v3424 = vunpack.c.l.b16 %v437
  %v3425 = vunpack.c.l.b16 %v438
  %v3426 = vunpack.c.l.b16 %v439
  %v3427 = vunpack.c.l.b16 %v440
  %v3428 = vunpack.c.l.b16 %v441
  %v3429 = vunpack.c.l.b16 %v442
  %v3430 = vunpack.c.l.b16 %v443
  %v3431 = vunpack.c.l.b16 %v444
  %v3432 = vunpack.c.l.b16 %v445
  %v3433 = vunpack.c.l.b16 %v446
  %v3434 = vunpack.c.l.b16 %v447
  %v3435 = vunpack.c.l.b16 %v448
  %v3436 = vunpack.c.l.b16 %v449
  %v3437 = vunpack.c.l.b16 %v450
  %v3438 = vunpack.c.l.b16 %v451
  %v3439 = vunpack.c.l.b16 %v452
  %v3440 = vunpack.c.l.b16 %v453
  %v3441 = vunpack.c.l.b16 %v454
  %v3442 = vunpack.c.l.b16 %v455
  %v3443 = vunpack.c.l.b16 %v456
  %v3444 = vunpack.c.l.b16 %v457
  %v3445 = vunpack.c.l.b16 %v458
  %v3446 = vunpack.c.l.b16 %v459
  %v3447 = vunpack.c.l.b16 %v460
  %v3448 = vpack.c.b16 %v3417, %v3416
  %v3449 = vpack.c.b16 %v3419, %v3418
  %v3450 = vpack.c.b16 %v3421, %v3420
  %v3451 = vpack.c.b16 %v3423, %v3422
  %v3452 = vpack.c.b16 %v3425, %v3424
  %v3453 = vpack.c.b16 %v3427, %v3426
  %v3454 = vpack.c.b16 %v3429, %v3428
  %v3455 = vpack.c.b16 %v3431, %v3430
  %v3456 = vpack.c.b16 %v3433, %v3432
  %v3457 = vpack.c.b16 %v3435, %v3434
  %v3458 = vpack.c.b16 %v3437, %v3436
  %v3459 = vpack.c.b16 %v3439, %v3438
  %v3460 = vpack.c.b16 %v3441, %v3440
  %v3461 = vpack.c.b16 %v3443, %v3442
  %v3462 = vpack.c.b16 %v3445, %v3444
  %v3463 = vpack.c.b16 %v3447, %v3446
  %3480 = vmatprep.subr.bf16.mxu0 0
  %3481 = vmatpush1.bf16.msra.mxu0 %v3448
  %3482 = vmatprep.subr.bf16.mxu0 0
  %3483 = vmatpush1.bf16.msra.mxu0 %v3449
  %3484 = vmatprep.subr.bf16.mxu0 0
  %3485 = vmatpush1.bf16.msra.mxu0 %v3450
  %3486 = vmatprep.subr.bf16.mxu0 0
  %3487 = vmatpush1.bf16.msra.mxu0 %v3451
  %3488 = vmatprep.subr.bf16.mxu0 0
  %3489 = vmatpush1.bf16.msra.mxu0 %v3452
  %3490 = vmatprep.subr.bf16.mxu0 0
  %3491 = vmatpush1.bf16.msra.mxu0 %v3453
  %3492 = vmatprep.subr.bf16.mxu0 0
  %3493 = vmatpush1.bf16.msra.mxu0 %v3454
  %3494 = vmatprep.subr.bf16.mxu0 0
  %3495 = vmatpush1.bf16.msra.mxu0 %v3455
  %3496 = vmatprep.subr.bf16.mxu0 0
  %3497 = vmatpush1.bf16.msra.mxu0 %v3456
  %3498 = vmatprep.subr.bf16.mxu0 0
  %3499 = vmatpush1.bf16.msra.mxu0 %v3457
  %3500 = vmatprep.subr.bf16.mxu0 0
  %3501 = vmatpush1.bf16.msra.mxu0 %v3458
  %3502 = vmatprep.subr.bf16.mxu0 0
  %3503 = vmatpush1.bf16.msra.mxu0 %v3459
  %3504 = vmatprep.subr.bf16.mxu0 0
  %3505 = vmatpush1.bf16.msra.mxu0 %v3460
  %3506 = vmatprep.subr.bf16.mxu0 0
  %3507 = vmatpush1.bf16.msra.mxu0 %v3461
  %3508 = vmatprep.subr.bf16.mxu0 0
  %3509 = vmatpush1.bf16.msra.mxu0 %v3462
  %3510 = vmatprep.subr.bf16.mxu0 0
  %3511 = vmatpush1.bf16.msra.mxu0 %v3463
  %3512 = vmatprep.mubr.bf16.mxu0 %v3377
  %3513 = vmatmul.mubr.bf16.gmra.mrb[0].mxu0 %v3376
  %v3514 = vpop.f32.mrb[0].mxu0
  %v3515 = vadd.f32 %v3382, %v3514
  %v3516 = vpop.f32.mrb[0].mxu0
  %v3517 = vpop.f32.mrb[0].mxu0
  %v3518 = vpop.f32.mrb[0].mxu0
  %3519 = vdwg.mxu0
  %3520 = vst [vmem:[%s8] sm:$0xff] %v3515
  // Predicated region
  $region34: #{prepare_gallery_cache.1} parent=0 // pred_check
    _
  $region35: #{prepare_gallery_cache.1} parent=0 // pred_check_branch
    %3522 = sbr.rel (0) target = $region37
  $region36: #{prepare_gallery_cache.1} parent=0 // pred_region
    _
  $region37: #{prepare_gallery_cache.1} parent=0 // pred_fallthru
    _
  // Predicated region
  $region38: #{prepare_gallery_cache.1} parent=0 // pred_check
    _
  $region39: #{prepare_gallery_cache.1} parent=0 // pred_check_branch
    %3524 = sbr.rel (0) target = $region41
  $region40: #{prepare_gallery_cache.1} parent=0 // pred_region
    _
  $region41: #{prepare_gallery_cache.1} parent=0 // pred_fallthru
    _

</llo_original>
